<compile_context>
chip_gen: v5e
topology: v5e:2x2
jax: 0.10.0
libtpu: 0.0.40
codegen_flags: <defaults>
</compile_context>

<pallas_src>
import functools

import numpy as np

import jax
import jax.numpy as jnp
from jax.experimental import pallas as pl
from jax.experimental.pallas import tpu as pltpu

EPS = 1e-5  # torch.nn.InstanceNorm2d default eps


# ---------------------------------------------------------------------------
# In-kernel helpers
# ---------------------------------------------------------------------------
def _instnorm_relu(y):
    # y: [C, L] f32. InstanceNorm2d(affine=False) over all spatial positions, then relu.
    # Centered (two-pass) variance: y is resident in vregs here, so the second read is free
    # and avoids E[x^2]-mean^2 cancellation.
    inv_n = 1.0 / y.shape[1]
    mean = jnp.sum(y, axis=1, keepdims=True) * inv_n
    d = y - mean
    var = jnp.sum(d * d, axis=1, keepdims=True) * inv_n
    return jnp.maximum(d * jax.lax.rsqrt(var + EPS), 0.0)


# ---------------------------------------------------------------------------
# Fused Pallas kernel (per batch element)
# ---------------------------------------------------------------------------
def fused_so3_block_kernel(g_ref, w_ref, x_ref, wi_ref, wj_ref, ws_ref, o_ref,
                           *, KS, KI, A, P, Co, intra_src):
    # g_ref : [1, C,  NN, L] bf16  neighbor-gathered features   (L = A*P, lane = a*P + p)
    # w_ref : [1, KS, NN, L] bf16  kernel-correlation weights
    # x_ref : [1, C,  L]     bf16  raw input features (skip branch)
    # wi_ref: [KS, Co, C]    bf16  inter BasicSO3Conv weight, per kernel point k
    # wj_ref: [KI, Co, Co]   bf16  intra weight, per anchor-adjacency tap j
    # ws_ref: [Co, C]        bf16  skip Conv2d(1x1) weight (bias dropped — see header)
    # o_ref : [1, Co, L]     f32
    _, C, NN, L = g_ref.shape

    # ---- inter conv: neighbor aggregation, NN-outer so g is read once (not KS times) ----
    g = g_ref[0]                                                # [C, NN, L] bf16
    w = w_ref[0]                                                # [KS, NN, L] bf16 (tiny vs g)
    accs = [jnp.zeros((C, L), jnp.float32) for _ in range(KS)]
    for n in range(NN):                                         # NN, KS small: static unroll
        gn = g[:, n, :].astype(jnp.float32)                     # widen in vregs (v5e: no bf16 VALU)
        for k in range(KS):
            wkn = w[k, n:n + 1, :].astype(jnp.float32)          # [1, L]
            accs[k] = accs[k] + gn * wkn

    # ---- inter 1x1 conv: per-k slab folded straight into the MXU accumulation ----
    y = jnp.zeros((Co, L), jnp.float32)
    for k in range(KS):
        y = y + jnp.dot(wi_ref[k], accs[k].astype(jnp.bfloat16),
                        preferred_element_type=jnp.float32)     # [Co, L]
    x_inter = _instnorm_relu(y)                                 # [Co, L] f32

    # ---- intra conv: KI block matmuls on anchor-permuted lane slabs (no dense w_exp) ----
    xib = x_inter.astype(jnp.bfloat16)
    yi = jnp.zeros((Co, L), jnp.float32)
    for j in range(KI):
        src = intra_src[j]                                      # static python tuple
        d = src[0] % A
        if all(src[a] == a for a in range(A)):
            xg = xib                                            # identity tap
        elif all(src[a] == (a + d) % A for a in range(A)):
            # cyclic anchor shift -> single lane-block rotation (2 slices)
            xg = jnp.concatenate([xib[:, d * P:], xib[:, :d * P]], axis=1)
        else:
            # general adjacency table -> A static lane slices
            xg = jnp.concatenate([xib[:, s * P:(s + 1) * P] for s in src], axis=1)
        yi = yi + jnp.dot(wj_ref[j], xg, preferred_element_type=jnp.float32)
    x_intra = _instnorm_relu(yi)                                # [Co, L] f32

    # ---- skip branch: 1x1 conv + InstanceNorm + relu (bias cancelled by the norm) ----
    ys = jnp.dot(ws_ref[...], x_ref[0], preferred_element_type=jnp.float32)
    x_skip = _instnorm_relu(ys)

    o_ref[0] = (x_intra + x_skip).astype(o_ref.dtype)


def _vmem_limit_bytes():
    # Per-generation scoped-VMEM budget: ~75% of physical VMEM, capped at 100 MiB.
    #   v5e/v6e (128 MiB physical) -> 96 MiB; v7x (64 MiB physical) -> 48 MiB.
    try:
        cap = pltpu.get_tpu_info().vmem_capacity_bytes
    except Exception:
        cap = 128 * 1024 * 1024
    return int(min(cap * 3 // 4, 100 * 1024 * 1024))


def fused_so3_block(g, wt, x, wi, wj, ws, *, KS, KI, A, P, Co, intra_src):
    B, C, NN, L = g.shape
    kernel = functools.partial(fused_so3_block_kernel, KS=KS, KI=KI, A=A, P=P, Co=Co,
                               intra_src=intra_src)
    return pl.pallas_call(
        kernel,
        out_shape=jax.ShapeDtypeStruct((B, Co, L), jnp.float32),
        grid_spec=pltpu.PrefetchScalarGridSpec(
            num_scalar_prefetch=0,
            grid=(B,),
            in_specs=[
                pl.BlockSpec((1, C, NN, L), lambda b: (b, 0, 0, 0)),
                pl.BlockSpec((1, KS, NN, L), lambda b: (b, 0, 0, 0)),
                pl.BlockSpec((1, C, L), lambda b: (b, 0, 0)),
                pl.BlockSpec((KS, Co, C), lambda b: (0, 0, 0)),
                pl.BlockSpec((KI, Co, Co), lambda b: (0, 0, 0)),
                pl.BlockSpec((Co, C), lambda b: (0, 0)),
            ],
            out_specs=pl.BlockSpec((1, Co, L), lambda b: (b, 0, 0)),
        ),
        compiler_params=pltpu.CompilerParams(
            dimension_semantics=("parallel",),       # batches shard across TCs (megacore)
            vmem_limit_bytes=_vmem_limit_bytes(),    # per-generation scoped-VMEM budget
        ),
    )(g, wt, x, wi, wj, ws)


# ---------------------------------------------------------------------------
# Full block forward (thin JAX glue around the single fused Pallas kernel)
# ---------------------------------------------------------------------------
def separable_so3_conv_block(weights, feats, inter_idx, inter_w, intra_idx):
    """
    feats     : [B, C_in, P, A]        spherical point-cloud features
    inter_idx : [B, P, NN] int32       neighbor indices into the point dim
    inter_w   : [B, A, KS, P, NN] f32  precomputed kernel-correlation weights
    intra_idx : [A, KI] int32          anchor-rotation adjacency table (compile-time constant)
    returns (inter_idx, inter_w, sample_idx, out_feats [B, C_out, P, A])
    """
    B, C_in, P, A = feats.shape
    KS, NN = inter_w.shape[2], inter_w.shape[4]
    intra_np = np.asarray(intra_idx).astype(np.int32)   # constant table (sptk.get_anchors())
    KI = intra_np.shape[1]
    Co = weights["W_inter"].shape[0]
    L = A * P

    # ---- layout prep: lane axis = L = a*P + p everywhere, activations in bf16 ----
    feats_l = jnp.transpose(feats, (0, 1, 3, 2)).reshape(B, C_in, L)       # [B, C, L]
    feats_b = feats_l.astype(jnp.bfloat16)

    # Neighbor gather produced DIRECTLY in kernel layout and in bf16 (halves the HBM bytes
    # of the NN-inflated tensor, the largest HBM consumer).
    # TODO(synk): at production sizes move this gather in-kernel (scalar-prefetched
    #             inter_idx + DMA gather from an ANY-space feats ref) so the NN-inflated
    #             tensor never touches HBM at all.
    idx_t = jnp.transpose(inter_idx, (0, 2, 1))                            # [B, NN, P]
    anchor_off = jnp.arange(A, dtype=jnp.int32) * P                        # [A]
    idx_full = (idx_t[:, :, None, :] + anchor_off[None, None, :, None]
                ).reshape(B, NN, L)                                        # [B, NN, L]
    g = jax.vmap(lambda f, i: jnp.take(f, i, axis=1))(feats_b, idx_full)   # [B, C, NN, L] bf16

    # inter_w native [B,A,KS,P,NN] -> kernel layout [B,KS,NN,L], bf16
    wt = jnp.transpose(inter_w, (0, 2, 4, 1, 3)).reshape(B, KS, NN, L).astype(jnp.bfloat16)

    # ---- weight prep (tiny, host-side): per-tap slabs, bf16 ----
    wi = jnp.transpose(weights["W_inter"].reshape(Co, C_in, KS),
                       (2, 0, 1)).astype(jnp.bfloat16)                     # [KS, Co, C]
    wj = jnp.transpose(weights["W_intra"].reshape(Co, Co, KI),
                       (2, 0, 1)).astype(jnp.bfloat16)                     # [KI, Co, Co]
    ws = weights["W_skip"].astype(jnp.bfloat16)                            # [Co, C]
    # b_skip intentionally unused: per-channel bias is a no-op under InstanceNorm2d(affine=False).

    # anchor-adjacency permutations as static python tuples (kernel compile-time constants)
    intra_src = tuple(tuple(int(v) for v in intra_np[:, j]) for j in range(KI))

    # ---- single fused Pallas kernel ----
    out_l = fused_so3_block(g, wt, feats_b, wi, wj, ws,
                            KS=KS, KI=KI, A=A, P=P, Co=Co, intra_src=intra_src)
    out_feats = jnp.transpose(out_l.reshape(B, Co, A, P), (0, 1, 3, 2))    # [B, Co, P, A]

    sample_idx = jnp.arange(P, dtype=jnp.int32)   # stride == 1 -> identity sampling
    return inter_idx, inter_w, sample_idx, out_feats


# ---------------------------------------------------------------------------
# Pure-JAX f32 reference (ground-truth semantics, bias included)
# ---------------------------------------------------------------------------
def _instnorm_relu_ref(y):  # y: [B, C, P, A]
    mean = y.mean(axis=(2, 3), keepdims=True)
    var = ((y - mean) ** 2).mean(axis=(2, 3), keepdims=True)
    return jnp.maximum((y - mean) / jnp.sqrt(var + EPS), 0.0)


def reference_forward(weights, feats, inter_idx, inter_w, intra_idx):
    B, C_in, P, A = feats.shape
    KS = inter_w.shape[2]
    KI = np.asarray(intra_idx).shape[1]
    Co = weights["W_inter"].shape[0]
    hp = jax.lax.Precision.HIGHEST

    gathered = jax.vmap(lambda f, idx: f[:, idx, :])(feats, inter_idx)   # [B,C,P,NN,A]
    new = jnp.einsum('bcpna,bakpn->bckpa', gathered, inter_w, precision=hp)
    y = jnp.einsum('oc,bcpa->bopa', weights["W_inter"],
                   new.reshape(B, C_in * KS, P, A), precision=hp)
    x_inter = _instnorm_relu_ref(y)

    xg = x_inter[:, :, :, np.asarray(intra_idx)]                         # [B,Co,P,A,KI]
    xg = jnp.transpose(xg, (0, 1, 4, 2, 3)).reshape(B, Co * KI, P, A)
    yi = jnp.einsum('oc,bcpa->bopa', weights["W_intra"], xg, precision=hp)
    x_intra = _instnorm_relu_ref(yi)

    ys = jnp.einsum('oc,bcpa->bopa', weights["W_skip"], feats, precision=hp)
    ys = ys + weights["b_skip"].reshape(1, Co, 1, 1)                     # cancelled by norm
    skip = _instnorm_relu_ref(ys)
    return x_intra + skip


# ---------------------------------------------------------------------------
def init_weights(key, dim_in, dim_out, ks, ki):
    k1, k2, k3, k4 = jax.random.split(key, 4)
    w = {
        "W_inter": jax.random.normal(k1, (dim_out, dim_in * ks), jnp.float32)
        * (1.0 / (dim_in * ks) ** 0.5),
        "W_intra": jax.random.normal(k2, (dim_out, dim_out * ki), jnp.float32)
        * (1.0 / (dim_out * ki) ** 0.5),
        "W_skip": jax.random.normal(k3, (dim_out, dim_in), jnp.float32)
        * (1.0 / dim_in ** 0.5),
        "b_skip": jax.random.normal(k4, (dim_out, 1), jnp.float32) * 0.01,
    }
    # Store weights at bf16 precision (kernel runs bf16 matmuls); keep f32 containers so the
    # f32 reference and the kernel use numerically identical weight values.
    return jax.tree_util.tree_map(
        lambda a: a.astype(jnp.bfloat16).astype(jnp.float32), w)


if __name__ == "__main__":
    B, C_in, C_out = 2, 4, 8
    P, A, NN, KS, KI = 128, 4, 8, 3, 3   # P chosen so L = A*P = 512 is lane-dense

    key = jax.random.PRNGKey(0)
    kf, ki_, kw, kp = jax.random.split(key, 4)

    # Activations/correlation weights rounded to bf16 values (kept in f32 containers) so the
    # kernel's bf16 data path and the f32 reference consume numerically identical inputs.
    feats = jax.random.normal(kf, (B, C_in, P, A), jnp.float32)
    feats = feats.astype(jnp.bfloat16).astype(jnp.float32)
    inter_idx = jax.random.randint(ki_, (B, P, NN), 0, P).astype(jnp.int32)
    inter_w = jax.nn.softmax(
        jax.random.normal(kw, (B, A, KS, P, NN), jnp.float32), axis=-1)
    inter_w = inter_w.astype(jnp.bfloat16).astype(jnp.float32)
    # deterministic synthetic anchor-adjacency table (stand-in for sptk's icosahedral table)
    intra_idx = ((np.arange(A)[:, None] + np.arange(KI)[None, :]) % A).astype(np.int32)

    weights = init_weights(kp, C_in, C_out, KS, KI)

    _, _, sample_idx, out_feats = separable_so3_conv_block(
        weights, feats, inter_idx, inter_w, intra_idx)
    out_feats = jax.block_until_ready(out_feats)

    ref = reference_forward(weights, feats, inter_idx, inter_w, intra_idx)
    assert out_feats.shape == (B, C_out, P, A)
    assert bool(jnp.allclose(out_feats, ref, atol=4e-2, rtol=4e-2)), "mismatch vs reference"

    print("KERNEL_OK")
</pallas_src>

<mosaic_0001>
module attributes {stable_mosaic.version = 11 : i64} {
  func.func @fused_so3_block_kernel(%arg0: i32, %arg1: memref<1x4x8x512xbf16, #tpu.memory_space<vmem>>, %arg2: memref<1x3x8x512xbf16, #tpu.memory_space<vmem>>, %arg3: memref<1x4x512xbf16, #tpu.memory_space<vmem>>, %arg4: memref<3x8x4xbf16, #tpu.memory_space<vmem>>, %arg5: memref<3x8x8xbf16, #tpu.memory_space<vmem>>, %arg6: memref<8x4xbf16, #tpu.memory_space<vmem>>, %arg7: memref<1x8x512xf32, #tpu.memory_space<vmem>>) attributes {dimension_semantics = [#tpu.dimension_semantics<parallel>], iteration_bounds = array<i64: 2>, scalar_prefetch = 0 : i64, scratch_operands = 0 : i64, tpu.core_type = #tpu.core_type<tc>, window_params = [{transform_indices = @transform_0, window_bounds = array<i64: 1, 4, 8, 512>}, {transform_indices = @transform_1, window_bounds = array<i64: 1, 3, 8, 512>}, {transform_indices = @transform_2, window_bounds = array<i64: 1, 4, 512>}, {pipeline_mode = #tpu.pipeline_mode<synchronous>, transform_indices = @transform_3, window_bounds = array<i64: 3, 8, 4>}, {pipeline_mode = #tpu.pipeline_mode<synchronous>, transform_indices = @transform_4, window_bounds = array<i64: 3, 8, 8>}, {pipeline_mode = #tpu.pipeline_mode<synchronous>, transform_indices = @transform_5, window_bounds = array<i64: 8, 4>}, {transform_indices = @transform_6, window_bounds = array<i64: 1, 8, 512>}]} {
    %c0 = arith.constant 0 : index
    %c0_0 = arith.constant 0 : index
    %c0_1 = arith.constant 0 : index
    %c0_2 = arith.constant 0 : index
    %0 = vector.load %arg1[%c0, %c0_0, %c0_1, %c0_2] : memref<1x4x8x512xbf16, #tpu.memory_space<vmem>>, vector<1x4x8x512xbf16>
    %1 = vector.shape_cast %0 : vector<1x4x8x512xbf16> to vector<4x8x512xbf16>
    %c0_3 = arith.constant 0 : index
    %c0_4 = arith.constant 0 : index
    %c0_5 = arith.constant 0 : index
    %c0_6 = arith.constant 0 : index
    %2 = vector.load %arg2[%c0_3, %c0_4, %c0_5, %c0_6] : memref<1x3x8x512xbf16, #tpu.memory_space<vmem>>, vector<1x3x8x512xbf16>
    %3 = vector.shape_cast %2 : vector<1x3x8x512xbf16> to vector<3x8x512xbf16>
    %cst = arith.constant 0.000000e+00 : f32
    %4 = vector.broadcast %cst : f32 to vector<4x512xf32>
    %cst_7 = arith.constant 0.000000e+00 : f32
    %5 = vector.broadcast %cst_7 : f32 to vector<4x512xf32>
    %cst_8 = arith.constant 0.000000e+00 : f32
    %6 = vector.broadcast %cst_8 : f32 to vector<4x512xf32>
    %7 = vector.extract_strided_slice %1 {offsets = [0, 0, 0], sizes = [4, 1, 512], strides = [1, 1, 1]} : vector<4x8x512xbf16> to vector<4x1x512xbf16>
    %8 = vector.shape_cast %7 : vector<4x1x512xbf16> to vector<4x512xbf16>
    %9 = arith.extf %8 : vector<4x512xbf16> to vector<4x512xf32>
    %10 = vector.extract_strided_slice %3 {offsets = [0, 0, 0], sizes = [1, 1, 512], strides = [1, 1, 1]} : vector<3x8x512xbf16> to vector<1x1x512xbf16>
    %11 = vector.shape_cast %10 : vector<1x1x512xbf16> to vector<1x512xbf16>
    %12 = arith.extf %11 : vector<1x512xbf16> to vector<1x512xf32>
    %13 = vector.broadcast %12 : vector<1x512xf32> to vector<4x512xf32>
    %14 = arith.mulf %9, %13 : vector<4x512xf32>
    %15 = arith.addf %4, %14 : vector<4x512xf32>
    %16 = vector.extract_strided_slice %3 {offsets = [1, 0, 0], sizes = [1, 1, 512], strides = [1, 1, 1]} : vector<3x8x512xbf16> to vector<1x1x512xbf16>
    %17 = vector.shape_cast %16 : vector<1x1x512xbf16> to vector<1x512xbf16>
    %18 = arith.extf %17 : vector<1x512xbf16> to vector<1x512xf32>
    %19 = vector.broadcast %18 : vector<1x512xf32> to vector<4x512xf32>
    %20 = arith.mulf %9, %19 : vector<4x512xf32>
    %21 = arith.addf %5, %20 : vector<4x512xf32>
    %22 = vector.extract_strided_slice %3 {offsets = [2, 0, 0], sizes = [1, 1, 512], strides = [1, 1, 1]} : vector<3x8x512xbf16> to vector<1x1x512xbf16>
    %23 = vector.shape_cast %22 : vector<1x1x512xbf16> to vector<1x512xbf16>
    %24 = arith.extf %23 : vector<1x512xbf16> to vector<1x512xf32>
    %25 = vector.broadcast %24 : vector<1x512xf32> to vector<4x512xf32>
    %26 = arith.mulf %9, %25 : vector<4x512xf32>
    %27 = arith.addf %6, %26 : vector<4x512xf32>
    %28 = vector.extract_strided_slice %1 {offsets = [0, 1, 0], sizes = [4, 1, 512], strides = [1, 1, 1]} : vector<4x8x512xbf16> to vector<4x1x512xbf16>
    %29 = vector.shape_cast %28 : vector<4x1x512xbf16> to vector<4x512xbf16>
    %30 = arith.extf %29 : vector<4x512xbf16> to vector<4x512xf32>
    %31 = vector.extract_strided_slice %3 {offsets = [0, 1, 0], sizes = [1, 1, 512], strides = [1, 1, 1]} : vector<3x8x512xbf16> to vector<1x1x512xbf16>
    %32 = vector.shape_cast %31 : vector<1x1x512xbf16> to vector<1x512xbf16>
    %33 = arith.extf %32 : vector<1x512xbf16> to vector<1x512xf32>
    %34 = vector.broadcast %33 : vector<1x512xf32> to vector<4x512xf32>
    %35 = arith.mulf %30, %34 : vector<4x512xf32>
    %36 = arith.addf %15, %35 : vector<4x512xf32>
    %37 = vector.extract_strided_slice %3 {offsets = [1, 1, 0], sizes = [1, 1, 512], strides = [1, 1, 1]} : vector<3x8x512xbf16> to vector<1x1x512xbf16>
    %38 = vector.shape_cast %37 : vector<1x1x512xbf16> to vector<1x512xbf16>
    %39 = arith.extf %38 : vector<1x512xbf16> to vector<1x512xf32>
    %40 = vector.broadcast %39 : vector<1x512xf32> to vector<4x512xf32>
    %41 = arith.mulf %30, %40 : vector<4x512xf32>
    %42 = arith.addf %21, %41 : vector<4x512xf32>
    %43 = vector.extract_strided_slice %3 {offsets = [2, 1, 0], sizes = [1, 1, 512], strides = [1, 1, 1]} : vector<3x8x512xbf16> to vector<1x1x512xbf16>
    %44 = vector.shape_cast %43 : vector<1x1x512xbf16> to vector<1x512xbf16>
    %45 = arith.extf %44 : vector<1x512xbf16> to vector<1x512xf32>
    %46 = vector.broadcast %45 : vector<1x512xf32> to vector<4x512xf32>
    %47 = arith.mulf %30, %46 : vector<4x512xf32>
    %48 = arith.addf %27, %47 : vector<4x512xf32>
    %49 = vector.extract_strided_slice %1 {offsets = [0, 2, 0], sizes = [4, 1, 512], strides = [1, 1, 1]} : vector<4x8x512xbf16> to vector<4x1x512xbf16>
    %50 = vector.shape_cast %49 : vector<4x1x512xbf16> to vector<4x512xbf16>
    %51 = arith.extf %50 : vector<4x512xbf16> to vector<4x512xf32>
    %52 = vector.extract_strided_slice %3 {offsets = [0, 2, 0], sizes = [1, 1, 512], strides = [1, 1, 1]} : vector<3x8x512xbf16> to vector<1x1x512xbf16>
    %53 = vector.shape_cast %52 : vector<1x1x512xbf16> to vector<1x512xbf16>
    %54 = arith.extf %53 : vector<1x512xbf16> to vector<1x512xf32>
    %55 = vector.broadcast %54 : vector<1x512xf32> to vector<4x512xf32>
    %56 = arith.mulf %51, %55 : vector<4x512xf32>
    %57 = arith.addf %36, %56 : vector<4x512xf32>
    %58 = vector.extract_strided_slice %3 {offsets = [1, 2, 0], sizes = [1, 1, 512], strides = [1, 1, 1]} : vector<3x8x512xbf16> to vector<1x1x512xbf16>
    %59 = vector.shape_cast %58 : vector<1x1x512xbf16> to vector<1x512xbf16>
    %60 = arith.extf %59 : vector<1x512xbf16> to vector<1x512xf32>
    %61 = vector.broadcast %60 : vector<1x512xf32> to vector<4x512xf32>
    %62 = arith.mulf %51, %61 : vector<4x512xf32>
    %63 = arith.addf %42, %62 : vector<4x512xf32>
    %64 = vector.extract_strided_slice %3 {offsets = [2, 2, 0], sizes = [1, 1, 512], strides = [1, 1, 1]} : vector<3x8x512xbf16> to vector<1x1x512xbf16>
    %65 = vector.shape_cast %64 : vector<1x1x512xbf16> to vector<1x512xbf16>
    %66 = arith.extf %65 : vector<1x512xbf16> to vector<1x512xf32>
    %67 = vector.broadcast %66 : vector<1x512xf32> to vector<4x512xf32>
    %68 = arith.mulf %51, %67 : vector<4x512xf32>
    %69 = arith.addf %48, %68 : vector<4x512xf32>
    %70 = vector.extract_strided_slice %1 {offsets = [0, 3, 0], sizes = [4, 1, 512], strides = [1, 1, 1]} : vector<4x8x512xbf16> to vector<4x1x512xbf16>
    %71 = vector.shape_cast %70 : vector<4x1x512xbf16> to vector<4x512xbf16>
    %72 = arith.extf %71 : vector<4x512xbf16> to vector<4x512xf32>
    %73 = vector.extract_strided_slice %3 {offsets = [0, 3, 0], sizes = [1, 1, 512], strides = [1, 1, 1]} : vector<3x8x512xbf16> to vector<1x1x512xbf16>
    %74 = vector.shape_cast %73 : vector<1x1x512xbf16> to vector<1x512xbf16>
    %75 = arith.extf %74 : vector<1x512xbf16> to vector<1x512xf32>
    %76 = vector.broadcast %75 : vector<1x512xf32> to vector<4x512xf32>
    %77 = arith.mulf %72, %76 : vector<4x512xf32>
    %78 = arith.addf %57, %77 : vector<4x512xf32>
    %79 = vector.extract_strided_slice %3 {offsets = [1, 3, 0], sizes = [1, 1, 512], strides = [1, 1, 1]} : vector<3x8x512xbf16> to vector<1x1x512xbf16>
    %80 = vector.shape_cast %79 : vector<1x1x512xbf16> to vector<1x512xbf16>
    %81 = arith.extf %80 : vector<1x512xbf16> to vector<1x512xf32>
    %82 = vector.broadcast %81 : vector<1x512xf32> to vector<4x512xf32>
    %83 = arith.mulf %72, %82 : vector<4x512xf32>
    %84 = arith.addf %63, %83 : vector<4x512xf32>
    %85 = vector.extract_strided_slice %3 {offsets = [2, 3, 0], sizes = [1, 1, 512], strides = [1, 1, 1]} : vector<3x8x512xbf16> to vector<1x1x512xbf16>
    %86 = vector.shape_cast %85 : vector<1x1x512xbf16> to vector<1x512xbf16>
    %87 = arith.extf %86 : vector<1x512xbf16> to vector<1x512xf32>
    %88 = vector.broadcast %87 : vector<1x512xf32> to vector<4x512xf32>
    %89 = arith.mulf %72, %88 : vector<4x512xf32>
    %90 = arith.addf %69, %89 : vector<4x512xf32>
    %91 = vector.extract_strided_slice %1 {offsets = [0, 4, 0], sizes = [4, 1, 512], strides = [1, 1, 1]} : vector<4x8x512xbf16> to vector<4x1x512xbf16>
    %92 = vector.shape_cast %91 : vector<4x1x512xbf16> to vector<4x512xbf16>
    %93 = arith.extf %92 : vector<4x512xbf16> to vector<4x512xf32>
    %94 = vector.extract_strided_slice %3 {offsets = [0, 4, 0], sizes = [1, 1, 512], strides = [1, 1, 1]} : vector<3x8x512xbf16> to vector<1x1x512xbf16>
    %95 = vector.shape_cast %94 : vector<1x1x512xbf16> to vector<1x512xbf16>
    %96 = arith.extf %95 : vector<1x512xbf16> to vector<1x512xf32>
    %97 = vector.broadcast %96 : vector<1x512xf32> to vector<4x512xf32>
    %98 = arith.mulf %93, %97 : vector<4x512xf32>
    %99 = arith.addf %78, %98 : vector<4x512xf32>
    %100 = vector.extract_strided_slice %3 {offsets = [1, 4, 0], sizes = [1, 1, 512], strides = [1, 1, 1]} : vector<3x8x512xbf16> to vector<1x1x512xbf16>
    %101 = vector.shape_cast %100 : vector<1x1x512xbf16> to vector<1x512xbf16>
    %102 = arith.extf %101 : vector<1x512xbf16> to vector<1x512xf32>
    %103 = vector.broadcast %102 : vector<1x512xf32> to vector<4x512xf32>
    %104 = arith.mulf %93, %103 : vector<4x512xf32>
    %105 = arith.addf %84, %104 : vector<4x512xf32>
    %106 = vector.extract_strided_slice %3 {offsets = [2, 4, 0], sizes = [1, 1, 512], strides = [1, 1, 1]} : vector<3x8x512xbf16> to vector<1x1x512xbf16>
    %107 = vector.shape_cast %106 : vector<1x1x512xbf16> to vector<1x512xbf16>
    %108 = arith.extf %107 : vector<1x512xbf16> to vector<1x512xf32>
    %109 = vector.broadcast %108 : vector<1x512xf32> to vector<4x512xf32>
    %110 = arith.mulf %93, %109 : vector<4x512xf32>
    %111 = arith.addf %90, %110 : vector<4x512xf32>
    %112 = vector.extract_strided_slice %1 {offsets = [0, 5, 0], sizes = [4, 1, 512], strides = [1, 1, 1]} : vector<4x8x512xbf16> to vector<4x1x512xbf16>
    %113 = vector.shape_cast %112 : vector<4x1x512xbf16> to vector<4x512xbf16>
    %114 = arith.extf %113 : vector<4x512xbf16> to vector<4x512xf32>
    %115 = vector.extract_strided_slice %3 {offsets = [0, 5, 0], sizes = [1, 1, 512], strides = [1, 1, 1]} : vector<3x8x512xbf16> to vector<1x1x512xbf16>
    %116 = vector.shape_cast %115 : vector<1x1x512xbf16> to vector<1x512xbf16>
    %117 = arith.extf %116 : vector<1x512xbf16> to vector<1x512xf32>
    %118 = vector.broadcast %117 : vector<1x512xf32> to vector<4x512xf32>
    %119 = arith.mulf %114, %118 : vector<4x512xf32>
    %120 = arith.addf %99, %119 : vector<4x512xf32>
    %121 = vector.extract_strided_slice %3 {offsets = [1, 5, 0], sizes = [1, 1, 512], strides = [1, 1, 1]} : vector<3x8x512xbf16> to vector<1x1x512xbf16>
    %122 = vector.shape_cast %121 : vector<1x1x512xbf16> to vector<1x512xbf16>
    %123 = arith.extf %122 : vector<1x512xbf16> to vector<1x512xf32>
    %124 = vector.broadcast %123 : vector<1x512xf32> to vector<4x512xf32>
    %125 = arith.mulf %114, %124 : vector<4x512xf32>
    %126 = arith.addf %105, %125 : vector<4x512xf32>
    %127 = vector.extract_strided_slice %3 {offsets = [2, 5, 0], sizes = [1, 1, 512], strides = [1, 1, 1]} : vector<3x8x512xbf16> to vector<1x1x512xbf16>
    %128 = vector.shape_cast %127 : vector<1x1x512xbf16> to vector<1x512xbf16>
    %129 = arith.extf %128 : vector<1x512xbf16> to vector<1x512xf32>
    %130 = vector.broadcast %129 : vector<1x512xf32> to vector<4x512xf32>
    %131 = arith.mulf %114, %130 : vector<4x512xf32>
    %132 = arith.addf %111, %131 : vector<4x512xf32>
    %133 = vector.extract_strided_slice %1 {offsets = [0, 6, 0], sizes = [4, 1, 512], strides = [1, 1, 1]} : vector<4x8x512xbf16> to vector<4x1x512xbf16>
    %134 = vector.shape_cast %133 : vector<4x1x512xbf16> to vector<4x512xbf16>
    %135 = arith.extf %134 : vector<4x512xbf16> to vector<4x512xf32>
    %136 = vector.extract_strided_slice %3 {offsets = [0, 6, 0], sizes = [1, 1, 512], strides = [1, 1, 1]} : vector<3x8x512xbf16> to vector<1x1x512xbf16>
    %137 = vector.shape_cast %136 : vector<1x1x512xbf16> to vector<1x512xbf16>
    %138 = arith.extf %137 : vector<1x512xbf16> to vector<1x512xf32>
    %139 = vector.broadcast %138 : vector<1x512xf32> to vector<4x512xf32>
    %140 = arith.mulf %135, %139 : vector<4x512xf32>
    %141 = arith.addf %120, %140 : vector<4x512xf32>
    %142 = vector.extract_strided_slice %3 {offsets = [1, 6, 0], sizes = [1, 1, 512], strides = [1, 1, 1]} : vector<3x8x512xbf16> to vector<1x1x512xbf16>
    %143 = vector.shape_cast %142 : vector<1x1x512xbf16> to vector<1x512xbf16>
    %144 = arith.extf %143 : vector<1x512xbf16> to vector<1x512xf32>
    %145 = vector.broadcast %144 : vector<1x512xf32> to vector<4x512xf32>
    %146 = arith.mulf %135, %145 : vector<4x512xf32>
    %147 = arith.addf %126, %146 : vector<4x512xf32>
    %148 = vector.extract_strided_slice %3 {offsets = [2, 6, 0], sizes = [1, 1, 512], strides = [1, 1, 1]} : vector<3x8x512xbf16> to vector<1x1x512xbf16>
    %149 = vector.shape_cast %148 : vector<1x1x512xbf16> to vector<1x512xbf16>
    %150 = arith.extf %149 : vector<1x512xbf16> to vector<1x512xf32>
    %151 = vector.broadcast %150 : vector<1x512xf32> to vector<4x512xf32>
    %152 = arith.mulf %135, %151 : vector<4x512xf32>
    %153 = arith.addf %132, %152 : vector<4x512xf32>
    %154 = vector.extract_strided_slice %1 {offsets = [0, 7, 0], sizes = [4, 1, 512], strides = [1, 1, 1]} : vector<4x8x512xbf16> to vector<4x1x512xbf16>
    %155 = vector.shape_cast %154 : vector<4x1x512xbf16> to vector<4x512xbf16>
    %156 = arith.extf %155 : vector<4x512xbf16> to vector<4x512xf32>
    %157 = vector.extract_strided_slice %3 {offsets = [0, 7, 0], sizes = [1, 1, 512], strides = [1, 1, 1]} : vector<3x8x512xbf16> to vector<1x1x512xbf16>
    %158 = vector.shape_cast %157 : vector<1x1x512xbf16> to vector<1x512xbf16>
    %159 = arith.extf %158 : vector<1x512xbf16> to vector<1x512xf32>
    %160 = vector.broadcast %159 : vector<1x512xf32> to vector<4x512xf32>
    %161 = arith.mulf %156, %160 : vector<4x512xf32>
    %162 = arith.addf %141, %161 : vector<4x512xf32>
    %163 = vector.extract_strided_slice %3 {offsets = [1, 7, 0], sizes = [1, 1, 512], strides = [1, 1, 1]} : vector<3x8x512xbf16> to vector<1x1x512xbf16>
    %164 = vector.shape_cast %163 : vector<1x1x512xbf16> to vector<1x512xbf16>
    %165 = arith.extf %164 : vector<1x512xbf16> to vector<1x512xf32>
    %166 = vector.broadcast %165 : vector<1x512xf32> to vector<4x512xf32>
    %167 = arith.mulf %156, %166 : vector<4x512xf32>
    %168 = arith.addf %147, %167 : vector<4x512xf32>
    %169 = vector.extract_strided_slice %3 {offsets = [2, 7, 0], sizes = [1, 1, 512], strides = [1, 1, 1]} : vector<3x8x512xbf16> to vector<1x1x512xbf16>
    %170 = vector.shape_cast %169 : vector<1x1x512xbf16> to vector<1x512xbf16>
    %171 = arith.extf %170 : vector<1x512xbf16> to vector<1x512xf32>
    %172 = vector.broadcast %171 : vector<1x512xf32> to vector<4x512xf32>
    %173 = arith.mulf %156, %172 : vector<4x512xf32>
    %174 = arith.addf %153, %173 : vector<4x512xf32>
    %cst_9 = arith.constant 0.000000e+00 : f32
    %175 = vector.broadcast %cst_9 : f32 to vector<8x512xf32>
    %c0_10 = arith.constant 0 : index
    %c0_11 = arith.constant 0 : index
    %c0_12 = arith.constant 0 : index
    %176 = vector.load %arg4[%c0_10, %c0_11, %c0_12] : memref<3x8x4xbf16, #tpu.memory_space<vmem>>, vector<1x8x4xbf16>
    %177 = vector.shape_cast %176 : vector<1x8x4xbf16> to vector<8x4xbf16>
    %178 = arith.truncf %162 : vector<4x512xf32> to vector<4x512xbf16>
    %cst_13 = arith.constant dense<0.000000e+00> : vector<8x512xf32>
    %179 = tpu.matmul %177, %178, %cst_13 {dimension_numbers = #tpu.dot_dimension_numbers<[1], [0], [0], [1], [0, 0, 1, 1], [], []>} : vector<8x4xbf16>, vector<4x512xbf16>, vector<8x512xf32> -> vector<8x512xf32>
    %180 = arith.addf %175, %179 : vector<8x512xf32>
    %c1 = arith.constant 1 : index
    %c0_14 = arith.constant 0 : index
    %c0_15 = arith.constant 0 : index
    %181 = vector.load %arg4[%c1, %c0_14, %c0_15] : memref<3x8x4xbf16, #tpu.memory_space<vmem>>, vector<1x8x4xbf16>
    %182 = vector.shape_cast %181 : vector<1x8x4xbf16> to vector<8x4xbf16>
    %183 = arith.truncf %168 : vector<4x512xf32> to vector<4x512xbf16>
    %cst_16 = arith.constant dense<0.000000e+00> : vector<8x512xf32>
    %184 = tpu.matmul %182, %183, %cst_16 {dimension_numbers = #tpu.dot_dimension_numbers<[1], [0], [0], [1], [0, 0, 1, 1], [], []>} : vector<8x4xbf16>, vector<4x512xbf16>, vector<8x512xf32> -> vector<8x512xf32>
    %185 = arith.addf %180, %184 : vector<8x512xf32>
    %c2 = arith.constant 2 : index
    %c0_17 = arith.constant 0 : index
    %c0_18 = arith.constant 0 : index
    %186 = vector.load %arg4[%c2, %c0_17, %c0_18] : memref<3x8x4xbf16, #tpu.memory_space<vmem>>, vector<1x8x4xbf16>
    %187 = vector.shape_cast %186 : vector<1x8x4xbf16> to vector<8x4xbf16>
    %188 = arith.truncf %174 : vector<4x512xf32> to vector<4x512xbf16>
    %cst_19 = arith.constant dense<0.000000e+00> : vector<8x512xf32>
    %189 = tpu.matmul %187, %188, %cst_19 {dimension_numbers = #tpu.dot_dimension_numbers<[1], [0], [0], [1], [0, 0, 1, 1], [], []>} : vector<8x4xbf16>, vector<4x512xbf16>, vector<8x512xf32> -> vector<8x512xf32>
    %190 = arith.addf %185, %189 : vector<8x512xf32>
    %cst_20 = arith.constant dense<0.000000e+00> : vector<8xf32>
    %191 = vector.multi_reduction <add>, %190, %cst_20 [1] : vector<8x512xf32> to vector<8xf32>
    %192 = vector.shape_cast %191 : vector<8xf32> to vector<8x1xf32>
    %cst_21 = arith.constant 0.001953125 : f32
    %193 = vector.broadcast %cst_21 : f32 to vector<8x1xf32>
    %194 = arith.mulf %192, %193 : vector<8x1xf32>
    %195 = vector.broadcast %194 : vector<8x1xf32> to vector<8x512xf32>
    %196 = arith.subf %190, %195 : vector<8x512xf32>
    %197 = arith.mulf %196, %196 : vector<8x512xf32>
    %cst_22 = arith.constant dense<0.000000e+00> : vector<8xf32>
    %198 = vector.multi_reduction <add>, %197, %cst_22 [1] : vector<8x512xf32> to vector<8xf32>
    %199 = vector.shape_cast %198 : vector<8xf32> to vector<8x1xf32>
    %cst_23 = arith.constant 0.001953125 : f32
    %200 = vector.broadcast %cst_23 : f32 to vector<8x1xf32>
    %201 = arith.mulf %199, %200 : vector<8x1xf32>
    %cst_24 = arith.constant 9.99999974E-6 : f32
    %202 = vector.broadcast %cst_24 : f32 to vector<8x1xf32>
    %203 = arith.addf %201, %202 : vector<8x1xf32>
    %204 = math.rsqrt %203 : vector<8x1xf32>
    %205 = vector.broadcast %204 : vector<8x1xf32> to vector<8x512xf32>
    %206 = arith.mulf %196, %205 : vector<8x512xf32>
    %cst_25 = arith.constant 0.000000e+00 : f32
    %207 = vector.broadcast %cst_25 : f32 to vector<8x512xf32>
    %208 = arith.maximumf %206, %207 : vector<8x512xf32>
    %209 = arith.truncf %208 : vector<8x512xf32> to vector<8x512xbf16>
    %cst_26 = arith.constant 0.000000e+00 : f32
    %210 = vector.broadcast %cst_26 : f32 to vector<8x512xf32>
    %c0_27 = arith.constant 0 : index
    %c0_28 = arith.constant 0 : index
    %c0_29 = arith.constant 0 : index
    %211 = vector.load %arg5[%c0_27, %c0_28, %c0_29] : memref<3x8x8xbf16, #tpu.memory_space<vmem>>, vector<1x8x8xbf16>
    %212 = vector.shape_cast %211 : vector<1x8x8xbf16> to vector<8x8xbf16>
    %cst_30 = arith.constant dense<0.000000e+00> : vector<8x512xf32>
    %213 = tpu.matmul %212, %209, %cst_30 {dimension_numbers = #tpu.dot_dimension_numbers<[1], [0], [0], [1], [0, 0, 1, 1], [], []>} : vector<8x8xbf16>, vector<8x512xbf16>, vector<8x512xf32> -> vector<8x512xf32>
    %214 = arith.addf %210, %213 : vector<8x512xf32>
    %215 = vector.extract_strided_slice %209 {offsets = [0, 128], sizes = [8, 384], strides = [1, 1]} : vector<8x512xbf16> to vector<8x384xbf16>
    %216 = vector.extract_strided_slice %209 {offsets = [0, 0], sizes = [8, 128], strides = [1, 1]} : vector<8x512xbf16> to vector<8x128xbf16>
    %217 = tpu.concatenate %215, %216 in 1 : vector<8x384xbf16>, vector<8x128xbf16> -> vector<8x512xbf16>
    %c1_31 = arith.constant 1 : index
    %c0_32 = arith.constant 0 : index
    %c0_33 = arith.constant 0 : index
    %218 = vector.load %arg5[%c1_31, %c0_32, %c0_33] : memref<3x8x8xbf16, #tpu.memory_space<vmem>>, vector<1x8x8xbf16>
    %219 = vector.shape_cast %218 : vector<1x8x8xbf16> to vector<8x8xbf16>
    %cst_34 = arith.constant dense<0.000000e+00> : vector<8x512xf32>
    %220 = tpu.matmul %219, %217, %cst_34 {dimension_numbers = #tpu.dot_dimension_numbers<[1], [0], [0], [1], [0, 0, 1, 1], [], []>} : vector<8x8xbf16>, vector<8x512xbf16>, vector<8x512xf32> -> vector<8x512xf32>
    %221 = arith.addf %214, %220 : vector<8x512xf32>
    %222 = vector.extract_strided_slice %209 {offsets = [0, 256], sizes = [8, 256], strides = [1, 1]} : vector<8x512xbf16> to vector<8x256xbf16>
    %223 = vector.extract_strided_slice %209 {offsets = [0, 0], sizes = [8, 256], strides = [1, 1]} : vector<8x512xbf16> to vector<8x256xbf16>
    %224 = tpu.concatenate %222, %223 in 1 : vector<8x256xbf16>, vector<8x256xbf16> -> vector<8x512xbf16>
    %c2_35 = arith.constant 2 : index
    %c0_36 = arith.constant 0 : index
    %c0_37 = arith.constant 0 : index
    %225 = vector.load %arg5[%c2_35, %c0_36, %c0_37] : memref<3x8x8xbf16, #tpu.memory_space<vmem>>, vector<1x8x8xbf16>
    %226 = vector.shape_cast %225 : vector<1x8x8xbf16> to vector<8x8xbf16>
    %cst_38 = arith.constant dense<0.000000e+00> : vector<8x512xf32>
    %227 = tpu.matmul %226, %224, %cst_38 {dimension_numbers = #tpu.dot_dimension_numbers<[1], [0], [0], [1], [0, 0, 1, 1], [], []>} : vector<8x8xbf16>, vector<8x512xbf16>, vector<8x512xf32> -> vector<8x512xf32>
    %228 = arith.addf %221, %227 : vector<8x512xf32>
    %cst_39 = arith.constant dense<0.000000e+00> : vector<8xf32>
    %229 = vector.multi_reduction <add>, %228, %cst_39 [1] : vector<8x512xf32> to vector<8xf32>
    %230 = vector.shape_cast %229 : vector<8xf32> to vector<8x1xf32>
    %cst_40 = arith.constant 0.001953125 : f32
    %231 = vector.broadcast %cst_40 : f32 to vector<8x1xf32>
    %232 = arith.mulf %230, %231 : vector<8x1xf32>
    %233 = vector.broadcast %232 : vector<8x1xf32> to vector<8x512xf32>
    %234 = arith.subf %228, %233 : vector<8x512xf32>
    %235 = arith.mulf %234, %234 : vector<8x512xf32>
    %cst_41 = arith.constant dense<0.000000e+00> : vector<8xf32>
    %236 = vector.multi_reduction <add>, %235, %cst_41 [1] : vector<8x512xf32> to vector<8xf32>
    %237 = vector.shape_cast %236 : vector<8xf32> to vector<8x1xf32>
    %cst_42 = arith.constant 0.001953125 : f32
    %238 = vector.broadcast %cst_42 : f32 to vector<8x1xf32>
    %239 = arith.mulf %237, %238 : vector<8x1xf32>
    %cst_43 = arith.constant 9.99999974E-6 : f32
    %240 = vector.broadcast %cst_43 : f32 to vector<8x1xf32>
    %241 = arith.addf %239, %240 : vector<8x1xf32>
    %242 = math.rsqrt %241 : vector<8x1xf32>
    %243 = vector.broadcast %242 : vector<8x1xf32> to vector<8x512xf32>
    %244 = arith.mulf %234, %243 : vector<8x512xf32>
    %cst_44 = arith.constant 0.000000e+00 : f32
    %245 = vector.broadcast %cst_44 : f32 to vector<8x512xf32>
    %246 = arith.maximumf %244, %245 : vector<8x512xf32>
    %c0_45 = arith.constant 0 : index
    %c0_46 = arith.constant 0 : index
    %247 = vector.load %arg6[%c0_45, %c0_46] : memref<8x4xbf16, #tpu.memory_space<vmem>>, vector<8x4xbf16>
    %c0_47 = arith.constant 0 : index
    %c0_48 = arith.constant 0 : index
    %c0_49 = arith.constant 0 : index
    %248 = vector.load %arg3[%c0_47, %c0_48, %c0_49] : memref<1x4x512xbf16, #tpu.memory_space<vmem>>, vector<1x4x512xbf16>
    %249 = vector.shape_cast %248 : vector<1x4x512xbf16> to vector<4x512xbf16>
    %cst_50 = arith.constant dense<0.000000e+00> : vector<8x512xf32>
    %250 = tpu.matmul %247, %249, %cst_50 {dimension_numbers = #tpu.dot_dimension_numbers<[1], [0], [0], [1], [0, 0, 1, 1], [], []>} : vector<8x4xbf16>, vector<4x512xbf16>, vector<8x512xf32> -> vector<8x512xf32>
    %cst_51 = arith.constant dense<0.000000e+00> : vector<8xf32>
    %251 = vector.multi_reduction <add>, %250, %cst_51 [1] : vector<8x512xf32> to vector<8xf32>
    %252 = vector.shape_cast %251 : vector<8xf32> to vector<8x1xf32>
    %cst_52 = arith.constant 0.001953125 : f32
    %253 = vector.broadcast %cst_52 : f32 to vector<8x1xf32>
    %254 = arith.mulf %252, %253 : vector<8x1xf32>
    %255 = vector.broadcast %254 : vector<8x1xf32> to vector<8x512xf32>
    %256 = arith.subf %250, %255 : vector<8x512xf32>
    %257 = arith.mulf %256, %256 : vector<8x512xf32>
    %cst_53 = arith.constant dense<0.000000e+00> : vector<8xf32>
    %258 = vector.multi_reduction <add>, %257, %cst_53 [1] : vector<8x512xf32> to vector<8xf32>
    %259 = vector.shape_cast %258 : vector<8xf32> to vector<8x1xf32>
    %cst_54 = arith.constant 0.001953125 : f32
    %260 = vector.broadcast %cst_54 : f32 to vector<8x1xf32>
    %261 = arith.mulf %259, %260 : vector<8x1xf32>
    %cst_55 = arith.constant 9.99999974E-6 : f32
    %262 = vector.broadcast %cst_55 : f32 to vector<8x1xf32>
    %263 = arith.addf %261, %262 : vector<8x1xf32>
    %264 = math.rsqrt %263 : vector<8x1xf32>
    %265 = vector.broadcast %264 : vector<8x1xf32> to vector<8x512xf32>
    %266 = arith.mulf %256, %265 : vector<8x512xf32>
    %cst_56 = arith.constant 0.000000e+00 : f32
    %267 = vector.broadcast %cst_56 : f32 to vector<8x512xf32>
    %268 = arith.maximumf %266, %267 : vector<8x512xf32>
    %269 = arith.addf %246, %268 : vector<8x512xf32>
    %c0_57 = arith.constant 0 : index
    %c0_58 = arith.constant 0 : index
    %c0_59 = arith.constant 0 : index
    %270 = vector.load %arg7[%c0_57, %c0_58, %c0_59] : memref<1x8x512xf32, #tpu.memory_space<vmem>>, vector<1x8x512xf32>
    %271 = vector.shape_cast %270 : vector<1x8x512xf32> to vector<8x512xf32>
    %272 = vector.shape_cast %269 : vector<8x512xf32> to vector<1x8x512xf32>
    tpu.vector_store %arg7[%c0_57, %c0_58, %c0_59], %272 {strides = array<i32>} : memref<1x8x512xf32, #tpu.memory_space<vmem>>, vector<1x8x512xf32>,
    return
  }
  func.func @transform_0(%arg0: i32) -> (i32, i32, i32, i32) {
    %c0_i32 = arith.constant 0 : i32
    %c0_i32_0 = arith.constant 0 : i32
    %c0_i32_1 = arith.constant 0 : i32
    %c0_i32_2 = arith.constant 0 : i32
    return %arg0, %c0_i32, %c0_i32_0, %c0_i32_1 : i32, i32, i32, i32
  }
  func.func @transform_1(%arg0: i32) -> (i32, i32, i32, i32) {
    %c0_i32 = arith.constant 0 : i32
    %c0_i32_0 = arith.constant 0 : i32
    %c0_i32_1 = arith.constant 0 : i32
    %c0_i32_2 = arith.constant 0 : i32
    return %arg0, %c0_i32, %c0_i32_0, %c0_i32_1 : i32, i32, i32, i32
  }
  func.func @transform_2(%arg0: i32) -> (i32, i32, i32) {
    %c0_i32 = arith.constant 0 : i32
    %c0_i32_0 = arith.constant 0 : i32
    %c0_i32_1 = arith.constant 0 : i32
    return %arg0, %c0_i32, %c0_i32_0 : i32, i32, i32
  }
  func.func @transform_3(%arg0: i32) -> (i32, i32, i32) {
    %c0_i32 = arith.constant 0 : i32
    %c0_i32_0 = arith.constant 0 : i32
    %c0_i32_1 = arith.constant 0 : i32
    %c0_i32_2 = arith.constant 0 : i32
    return %c0_i32, %c0_i32_0, %c0_i32_1 : i32, i32, i32
  }
  func.func @transform_4(%arg0: i32) -> (i32, i32, i32) {
    %c0_i32 = arith.constant 0 : i32
    %c0_i32_0 = arith.constant 0 : i32
    %c0_i32_1 = arith.constant 0 : i32
    %c0_i32_2 = arith.constant 0 : i32
    return %c0_i32, %c0_i32_0, %c0_i32_1 : i32, i32, i32
  }
  func.func @transform_5(%arg0: i32) -> (i32, i32) {
    %c0_i32 = arith.constant 0 : i32
    %c0_i32_0 = arith.constant 0 : i32
    %c0_i32_1 = arith.constant 0 : i32
    return %c0_i32, %c0_i32_0 : i32, i32
  }
  func.func @transform_6(%arg0: i32) -> (i32, i32, i32) {
    %c0_i32 = arith.constant 0 : i32
    %c0_i32_0 = arith.constant 0 : i32
    %c0_i32_1 = arith.constant 0 : i32
    return %arg0, %c0_i32, %c0_i32_0 : i32, i32, i32
  }
}

</mosaic_0001>

<llo_original>
// kernel: tpu_custom_call.1
$region0: #{tpu_custom_call.1}
  #allocation0 [shape = 'u32[]', space=smem, size = 0x4, offset = 0x4, fixed_abs, tag = 'smem constant byte address 0x4 - core index']
  #allocation1 [shape = 'u32[72,128]{1,0:T(1,128)}', space=vmem, size = 0x9000, scoped, tag = 'internal scratch']
  %s0 = inlined_call_operand.hbm [shape: bf16[2,4,8,512], index: 0, kind: input, shape index: {}]
  %s1 = inlined_call_operand.hbm [shape: bf16[2,3,8,512], index: 1, kind: input, shape index: {}]
  %s2 = inlined_call_operand.vmem [shape: bf16[2,4,512], index: 2, kind: input, shape index: {}]
  %s3 = inlined_call_operand.vmem [shape: bf16[3,8,4], index: 3, kind: input, shape index: {}]
  %s4 = inlined_call_operand.hbm [shape: bf16[3,8,8], index: 4, kind: input, shape index: {}]
  %s5 = inlined_call_operand.vmem [shape: bf16[8,4], index: 5, kind: input, shape index: {}]
  %s6 = inlined_call_operand.hbm [shape: f32[2,8,512], index: 6, kind: output, shape index: {}]
  %s7 = sld [smem:[#allocation0]]
  $region69: #{tpu_custom_call.1} parent=0
    _
  %s9 = ssub.s32 1, %s7
  %s10 = scalar_select 0, %s9, %s7
  $region1: #{tpu_custom_call.1} parent=0
    #allocation2 [shape = 'u8[65536]{0}', space=vmem, size = 0x10000, scoped, tag = 'input window, operand 0']
    #allocation3 [shape = 's32[2]{0}', space=sflag, size = 0x8, scoped, tag = 'scoped memory for tpu_custom_call.1']
    #allocation4 [shape = 's32[2]{0}', space=sflag, size = 0x8, scoped, tag = 'scoped memory for tpu_custom_call.1']
    #allocation5 [shape = 'u8[49152]{0}', space=vmem, size = 0xc000, scoped, tag = 'input window, operand 1']
    #allocation6 [shape = 's32[2]{0}', space=sflag, size = 0x8, scoped, tag = 'scoped memory for tpu_custom_call.1']
    #allocation7 [shape = 'u8[6144]{0}', space=vmem, size = 0x1800, scoped, tag = 'input window, operand 4, single buffered']
    #allocation8 [shape = 'u8[32768]{0}', space=vmem, size = 0x8000, scoped, tag = 'output window, operand 0']
    %11 = vsyncpa [#allocation3], 0
    %s12 = scalar_lea.sflag [#allocation3], 1
    %13 = vsyncpa %s12, 0
    %14 = vsyncpa [#allocation6], 0
    %s15 = scalar_lea.sflag [#allocation6], 1
    %16 = vsyncpa %s15, 0
    %17 = vsyncpa [#allocation4], 0
    %s18 = scalar_lea.sflag [#allocation4], 1
    %19 = vsyncpa %s18, 0
    loop: start=0, step=1, limit=4
    $region2: #{tpu_custom_call.1} parent=1 // loop_pre_header
      _
    $region3: #{tpu_custom_call.1} parent=1 // loop_header
      %s21 = sphi 0, %s25
      %p22 = scmp.ge.s32.totalorder %s21, 4
      %s31 = sphi 0, %s33
      %s34 = sphi 0, %s31
      %s35 = sphi 0, %s34
      %s51 = sphi 0, %s35
      %s57 = sphi 0, %s59
      %s60 = sphi 0, %s57
      %s61 = sphi 0, %s60
      %s77 = sphi 0, %s61
      %s83 = sphi 0, %s85
      %s86 = sphi 0, %s83
      %s87 = sphi 0, %s86
      %s103 = sphi 0, %s87
      %s107 = sphi 0, %s107
      %s109 = sphi 0, %s107
      %s110 = sphi 0, %s109
      %s124 = sphi 0, %s110
      %s128 = sphi 0, %s128
      %s130 = sphi 0, %s128
      %s131 = sphi 0, %s130
      %s145 = sphi 0, %s131
      %s149 = sphi 0, %s149
      %s151 = sphi 0, %s149
      %s152 = sphi 0, %s151
      %s166 = sphi 0, %s152
      %s172 = sphi 0, %s174
      %s175 = sphi 0, %s172
      %s176 = sphi 0, %s175
      %s192 = sphi 0, %s176
    $region4: #{tpu_custom_call.1} parent=1 // loop_header_branch
      %24 = sbr.rel (%p22) target = $region8
    $region5: #{tpu_custom_call.1} parent=1 // loop_body
      %s26 = ssub.s32 %s21, 1
      %s27 = ssub.s32 %s21, 2
      %s28 = sadd.s32 %s21, 1
      %s29 = ssub.s32 %s21, %s28
      %p30 = scmp.eq.s32.totalorder %s29, 0
      %s32 = sadd.s32 %s31, 1
      %s33 = scalar_select %p30, %s31, %s32
      %p36 = pneg %p30
      %p37 = scmp.eq.s32.totalorder %s21, 1
      %p38 = por %p36, %p37
      %p39 = scmp.ne.s32.totalorder %s31, %s34
      %p40 = scmp.eq.s32.totalorder %s21, 0
      %p41 = por %p39, %p40
      %p42 = scmp.ne.s32.totalorder %s31, %s34
      %p43 = scmp.eq.s32.totalorder %s26, 1
      %p44 = por %p42, %p43
      %p45 = scmp.ne.s32.totalorder %s34, %s35
      %p46 = scmp.eq.s32.totalorder %s26, 0
      %p47 = por %p45, %p46
      %p48 = scmp.ne.s32.totalorder %s34, %s35
      %p49 = scmp.eq.s32.totalorder %s27, 1
      %p50 = por %p48, %p49
      %p52 = scmp.ne.s32.totalorder %s35, %s51
      %p53 = scmp.eq.s32.totalorder %s27, 0
      %p54 = por %p52, %p53
      %s55 = ssub.s32 %s21, %s28
      %p56 = scmp.eq.s32.totalorder %s55, 0
      %s58 = sadd.s32 %s57, 1
      %s59 = scalar_select %p56, %s57, %s58
      %p62 = pneg %p56
      %p63 = scmp.eq.s32.totalorder %s21, 1
      %p64 = por %p62, %p63
      %p65 = scmp.ne.s32.totalorder %s57, %s60
      %p66 = scmp.eq.s32.totalorder %s21, 0
      %p67 = por %p65, %p66
      %p68 = scmp.ne.s32.totalorder %s57, %s60
      %p69 = scmp.eq.s32.totalorder %s26, 1
      %p70 = por %p68, %p69
      %p71 = scmp.ne.s32.totalorder %s60, %s61
      %p72 = scmp.eq.s32.totalorder %s26, 0
      %p73 = por %p71, %p72
      %p74 = scmp.ne.s32.totalorder %s60, %s61
      %p75 = scmp.eq.s32.totalorder %s27, 1
      %p76 = por %p74, %p75
      %p78 = scmp.ne.s32.totalorder %s61, %s77
      %p79 = scmp.eq.s32.totalorder %s27, 0
      %p80 = por %p78, %p79
      %s81 = ssub.s32 %s21, %s28
      %p82 = scmp.eq.s32.totalorder %s81, 0
      %s84 = sadd.s32 %s83, 1
      %s85 = scalar_select %p82, %s83, %s84
      %p88 = pneg %p82
      %p89 = scmp.eq.s32.totalorder %s21, 1
      %p90 = por %p88, %p89
      %p91 = scmp.ne.s32.totalorder %s83, %s86
      %p92 = scmp.eq.s32.totalorder %s21, 0
      %p93 = por %p91, %p92
      %p94 = scmp.ne.s32.totalorder %s83, %s86
      %p95 = scmp.eq.s32.totalorder %s26, 1
      %p96 = por %p94, %p95
      %p97 = scmp.ne.s32.totalorder %s86, %s87
      %p98 = scmp.eq.s32.totalorder %s26, 0
      %p99 = por %p97, %p98
      %p100 = scmp.ne.s32.totalorder %s86, %s87
      %p101 = scmp.eq.s32.totalorder %s27, 1
      %p102 = por %p100, %p101
      %p104 = scmp.ne.s32.totalorder %s87, %s103
      %p105 = scmp.eq.s32.totalorder %s27, 0
      %p106 = por %p104, %p105
      %s108 = sadd.s32 %s107, 1
      %p111 = scmp.eq.s32.totalorder %s21, 1
      %p112 = scmp.ne.s32.totalorder %s107, %s109
      %p113 = scmp.eq.s32.totalorder %s21, 0
      %p114 = por %p112, %p113
      %p115 = scmp.ne.s32.totalorder %s107, %s109
      %p116 = scmp.eq.s32.totalorder %s26, 1
      %p117 = por %p115, %p116
      %p118 = scmp.ne.s32.totalorder %s109, %s110
      %p119 = scmp.eq.s32.totalorder %s26, 0
      %p120 = por %p118, %p119
      %p121 = scmp.ne.s32.totalorder %s109, %s110
      %p122 = scmp.eq.s32.totalorder %s27, 1
      %p123 = por %p121, %p122
      %p125 = scmp.ne.s32.totalorder %s110, %s124
      %p126 = scmp.eq.s32.totalorder %s27, 0
      %p127 = por %p125, %p126
      %s129 = sadd.s32 %s128, 1
      %p132 = scmp.eq.s32.totalorder %s21, 1
      %p133 = scmp.ne.s32.totalorder %s128, %s130
      %p134 = scmp.eq.s32.totalorder %s21, 0
      %p135 = por %p133, %p134
      %p136 = scmp.ne.s32.totalorder %s128, %s130
      %p137 = scmp.eq.s32.totalorder %s26, 1
      %p138 = por %p136, %p137
      %p139 = scmp.ne.s32.totalorder %s130, %s131
      %p140 = scmp.eq.s32.totalorder %s26, 0
      %p141 = por %p139, %p140
      %p142 = scmp.ne.s32.totalorder %s130, %s131
      %p143 = scmp.eq.s32.totalorder %s27, 1
      %p144 = por %p142, %p143
      %p146 = scmp.ne.s32.totalorder %s131, %s145
      %p147 = scmp.eq.s32.totalorder %s27, 0
      %p148 = por %p146, %p147
      %s150 = sadd.s32 %s149, 1
      %p153 = scmp.eq.s32.totalorder %s21, 1
      %p154 = scmp.ne.s32.totalorder %s149, %s151
      %p155 = scmp.eq.s32.totalorder %s21, 0
      %p156 = por %p154, %p155
      %p157 = scmp.ne.s32.totalorder %s149, %s151
      %p158 = scmp.eq.s32.totalorder %s26, 1
      %p159 = por %p157, %p158
      %p160 = scmp.ne.s32.totalorder %s151, %s152
      %p161 = scmp.eq.s32.totalorder %s26, 0
      %p162 = por %p160, %p161
      %p163 = scmp.ne.s32.totalorder %s151, %s152
      %p164 = scmp.eq.s32.totalorder %s27, 1
      %p165 = por %p163, %p164
      %p167 = scmp.ne.s32.totalorder %s152, %s166
      %p168 = scmp.eq.s32.totalorder %s27, 0
      %p169 = por %p167, %p168
      %s170 = ssub.s32 %s21, %s28
      %p171 = scmp.eq.s32.totalorder %s170, 0
      %s173 = sadd.s32 %s172, 1
      %s174 = scalar_select %p171, %s172, %s173
      %p177 = pneg %p171
      %p178 = scmp.eq.s32.totalorder %s21, 1
      %p179 = por %p177, %p178
      %p180 = scmp.ne.s32.totalorder %s172, %s175
      %p181 = scmp.eq.s32.totalorder %s21, 0
      %p182 = por %p180, %p181
      %p183 = scmp.ne.s32.totalorder %s172, %s175
      %p184 = scmp.eq.s32.totalorder %s26, 1
      %p185 = por %p183, %p184
      %p186 = scmp.ne.s32.totalorder %s175, %s176
      %p187 = scmp.eq.s32.totalorder %s26, 0
      %p188 = por %p186, %p187
      %p189 = scmp.ne.s32.totalorder %s175, %s176
      %p190 = scmp.eq.s32.totalorder %s27, 1
      %p191 = por %p189, %p190
      %p193 = scmp.ne.s32.totalorder %s176, %s192
      %p194 = scmp.eq.s32.totalorder %s27, 0
      %p195 = por %p193, %p194
      %p196 = scmp.le.s32.totalorder 1, %s21
      %p197 = scmp.lt.s32.totalorder %s21, 3
      %p198 = pnand %p196, %p197
      %p199 = pneg %p198
      // Predicated region
      $region9: #{tpu_custom_call.1} parent=5 // pred_check
        _
      $region10: #{tpu_custom_call.1} parent=5 // pred_check_branch
        %201 = sbr.rel (%p198) target = $region12
      $region11: #{tpu_custom_call.1} parent=5 // pred_region
        %s202 = ssub.s32 %s21, 1
        // Predicated region
        $region13: #{tpu_custom_call.1} parent=11 // pred_check
          %p203 = pneg %p120
        $region14: #{tpu_custom_call.1} parent=11 // pred_check_branch
          %205 = sbr.rel (%p203) target = $region16
        $region15: #{tpu_custom_call.1} parent=11 // pred_region
          _
        $region16: #{tpu_custom_call.1} parent=11 // pred_fallthru
          _
        // Predicated region
        $region17: #{tpu_custom_call.1} parent=11 // pred_check
          %p206 = pneg %p141
        $region18: #{tpu_custom_call.1} parent=11 // pred_check_branch
          %208 = sbr.rel (%p206) target = $region20
        $region19: #{tpu_custom_call.1} parent=11 // pred_region
          %210 = vsyncadd [#allocation6], 0
          %s211 = sshll.u32 %s4, 4
          %s212 = int_to_ptr.hbm [resolvable:$true] %s211
          %s213 = sshll.u32 [#allocation7], 4
          %s214 = int_to_ptr.vmem [resolvable:$true] %s213
          %219 = dma.hbm_to_vmem [thread:$0]  %s212, 192, %s214, [#allocation6], 64, 64, 4
        $region20: #{tpu_custom_call.1} parent=11 // pred_fallthru
          _
        // Predicated region
        $region21: #{tpu_custom_call.1} parent=11 // pred_check
          %p220 = pneg %p162
        $region22: #{tpu_custom_call.1} parent=11 // pred_check_branch
          %222 = sbr.rel (%p220) target = $region24
        $region23: #{tpu_custom_call.1} parent=11 // pred_region
          _
        $region24: #{tpu_custom_call.1} parent=11 // pred_fallthru
          _
      $region12: #{tpu_custom_call.1} parent=5 // pred_fallthru
        _
      %p223 = scmp.lt.s32.totalorder %s21, 2
      // Predicated region
      $region25: #{tpu_custom_call.1} parent=5 // pred_check
        %p224 = pneg %p223
      $region26: #{tpu_custom_call.1} parent=5 // pred_check_branch
        %226 = sbr.rel (%p224) target = $region28
      $region27: #{tpu_custom_call.1} parent=5 // pred_region
        // Predicated region
        $region29: #{tpu_custom_call.1} parent=27 // pred_check
          %p227 = pneg %p41
        $region30: #{tpu_custom_call.1} parent=27 // pred_check_branch
          %229 = sbr.rel (%p227) target = $region32
        $region31: #{tpu_custom_call.1} parent=27 // pred_region
          %s230 = sand.u32 %s31, 1
          %s231 = scalar_lea.sflag [#allocation3], %s230
          %s232 = sand.u32 %s31, 1
          %s233 = smul.addr %s232, 64
          %s234 = scalar_lea.vmem [#allocation2], %s233
          %236 = vsyncadd %s231, 0
          %s237 = smul.addr %s21, 16
          %s238 = smul.addr %s237, 4
          %s239 = scalar_lea.hbm %s0, %s238
          %s240 = sshll.u32 %s239, 4
          %s241 = int_to_ptr.hbm [resolvable:$true] %s240
          %s242 = sshll.u32 %s234, 4
          %s243 = int_to_ptr.vmem [resolvable:$true] %s242
          %248 = dma.hbm_to_vmem [thread:$0]  %s241, 1024, %s243, %s231, 256, 256, 16
        $region32: #{tpu_custom_call.1} parent=27 // pred_fallthru
          _
        // Predicated region
        $region33: #{tpu_custom_call.1} parent=27 // pred_check
          %p249 = pneg %p67
        $region34: #{tpu_custom_call.1} parent=27 // pred_check_branch
          %251 = sbr.rel (%p249) target = $region36
        $region35: #{tpu_custom_call.1} parent=27 // pred_region
          %s252 = sand.u32 %s21, 1
          %s253 = scalar_lea.sflag [#allocation6], %s252
          %s254 = sand.u32 %s57, 1
          %s255 = smul.addr %s254, 48
          %s256 = scalar_lea.vmem [#allocation5], %s255
          %258 = vsyncadd %s253, 0
          %s259 = smul.addr %s21, 12
          %s260 = smul.addr %s259, 4
          %s261 = scalar_lea.hbm %s1, %s260
          %s262 = sshll.u32 %s261, 4
          %s263 = int_to_ptr.hbm [resolvable:$true] %s262
          %s264 = sshll.u32 %s256, 4
          %s265 = int_to_ptr.vmem [resolvable:$true] %s264
          %270 = dma.hbm_to_vmem [thread:$0]  %s263, 768, %s265, %s253, 256, 256, 16
        $region36: #{tpu_custom_call.1} parent=27 // pred_fallthru
          _
        // Predicated region
        $region37: #{tpu_custom_call.1} parent=27 // pred_check
          %p271 = pneg %p93
        $region38: #{tpu_custom_call.1} parent=27 // pred_check_branch
          %273 = sbr.rel (%p271) target = $region40
        $region39: #{tpu_custom_call.1} parent=27 // pred_region
          %p274 = scmp.lt.s32.totalorder %s21, 1
          %s275 = scalar_select %p274, %s21, 1
          %s276 = smul.addr %s275, 4
          %s277 = smul.addr %s276, 2
          %s278 = scalar_lea.vmem %s2, %s277
        $region40: #{tpu_custom_call.1} parent=27 // pred_fallthru
          _
      $region28: #{tpu_custom_call.1} parent=5 // pred_fallthru
        _
      %p279 = scmp.le.s32.totalorder 1, %s21
      %p280 = scmp.lt.s32.totalorder %s21, 3
      %p281 = pnand %p279, %p280
      %p282 = pneg %p281
      // Predicated region
      $region41: #{tpu_custom_call.1} parent=5 // pred_check
        _
      $region42: #{tpu_custom_call.1} parent=5 // pred_check_branch
        %284 = sbr.rel (%p281) target = $region44
      $region43: #{tpu_custom_call.1} parent=5 // pred_region
        %s285 = ssub.s32 %s21, 1
        %s286 = sand.u32 %s34, 1
        %s287 = scalar_lea.sflag [#allocation3], %s286
        %s288 = sand.u32 %s34, 1
        %s289 = smul.addr %s288, 64
        %s290 = scalar_lea.vmem [#allocation2], %s289
        // Predicated region
        $region45: #{tpu_custom_call.1} parent=43 // pred_check
          %p291 = pneg %p47
        $region46: #{tpu_custom_call.1} parent=43 // pred_check_branch
          %293 = sbr.rel (%p291) target = $region48
        $region47: #{tpu_custom_call.1} parent=43 // pred_region
          %295 = dma.done %s287, 1024
        $region48: #{tpu_custom_call.1} parent=43 // pred_fallthru
          _
        %s296 = sand.u32 %s26, 1
        %s297 = scalar_lea.sflag [#allocation6], %s296
        %s298 = sand.u32 %s60, 1
        %s299 = smul.addr %s298, 48
        %s300 = scalar_lea.vmem [#allocation5], %s299
        // Predicated region
        $region49: #{tpu_custom_call.1} parent=43 // pred_check
          %p301 = pneg %p73
        $region50: #{tpu_custom_call.1} parent=43 // pred_check_branch
          %303 = sbr.rel (%p301) target = $region52
        $region51: #{tpu_custom_call.1} parent=43 // pred_region
          %305 = dma.done %s297, 768
        $region52: #{tpu_custom_call.1} parent=43 // pred_fallthru
          _
        // Predicated region
        $region53: #{tpu_custom_call.1} parent=43 // pred_check
          %p306 = pneg %p141
        $region54: #{tpu_custom_call.1} parent=43 // pred_check_branch
          %308 = sbr.rel (%p306) target = $region56
        $region55: #{tpu_custom_call.1} parent=43 // pred_region
          %310 = dma.done [#allocation6], 192
        $region56: #{tpu_custom_call.1} parent=43 // pred_fallthru
          _
        %s311 = sand.u32 %s34, 1
        %s312 = scalar_lea.sflag [#allocation3], %s311
        %s313 = sand.u32 %s34, 1
        %s314 = smul.addr %s313, 64
        %s315 = scalar_lea.vmem [#allocation2], %s314
        %p316 = pneg %p47
        %p317 = pneg %p44
        %s318 = sand.u32 %s26, 1
        %s319 = scalar_lea.sflag [#allocation6], %s318
        %s320 = sand.u32 %s60, 1
        %s321 = smul.addr %s320, 48
        %s322 = scalar_lea.vmem [#allocation5], %s321
        %p323 = pneg %p73
        %p324 = pneg %p70
        %p325 = scmp.lt.s32.totalorder %s26, 1
        %s326 = scalar_select %p325, %s26, 1
        %s327 = smul.addr %s326, 4
        %s328 = smul.addr %s327, 2
        %s329 = scalar_lea.vmem %s2, %s328
        %p330 = pneg %p99
        %p331 = pneg %p96
        %p332 = pneg %p120
        %p333 = pneg %p117
        %p334 = pneg %p141
        %p335 = pneg %p138
        %p336 = pneg %p162
        %p337 = pneg %p159
        %p338 = pneg %p188
        %p339 = pneg %p185
        %s340 = sand.u32 %s175, 1
        %s341 = scalar_lea.sflag [#allocation4], %s340
        %s342 = sand.u32 %s175, 1
        %s343 = smul.addr %s342, 32
        %s344 = scalar_lea.vmem [#allocation8], %s343
        %p345 = scmp.lt.s32.totalorder %s26, 1
        %s346 = scalar_select %p345, %s26, 1
        %s347 = smul.addr %s346, 4
        %s348 = smul.addr %s347, 2
        %s349 = scalar_lea.vmem %s2, %s348
        %v351 = vld [vmem:[%s290] sm:$0xff]
        %v352 = vld [vmem:[%s290 + $0x8] sm:$0xff]
        %v353 = vld [vmem:[%s290 + $0x10] sm:$0xff]
        %v354 = vld [vmem:[%s290 + $0x18] sm:$0xff]
        %v355 = vld [vmem:[%s290 + $0x20] sm:$0xff]
        %v356 = vld [vmem:[%s290 + $0x28] sm:$0xff]
        %v357 = vld [vmem:[%s290 + $0x30] sm:$0xff]
        %v358 = vld [vmem:[%s290 + $0x38] sm:$0xff]
        %v359 = vld [vmem:[%s300] sm:$0xff]
        %v360 = vld [vmem:[%s300 + $0x8] sm:$0xff]
        %v361 = vld [vmem:[%s300 + $0x10] sm:$0xff]
        %v362 = vld [vmem:[%s300 + $0x18] sm:$0xff]
        %v363 = vld [vmem:[%s300 + $0x20] sm:$0xff]
        %v364 = vld [vmem:[%s300 + $0x28] sm:$0xff]
        %v365 = vunpack.c.l.bf16 %v351
        %v366 = vunpack.c.h.bf16 %v351
        %v367 = vunpack.c.l.bf16 %v352
        %v368 = vunpack.c.h.bf16 %v352
        %v369 = vunpack.c.l.bf16 %v353
        %v370 = vunpack.c.h.bf16 %v353
        %v371 = vunpack.c.l.bf16 %v354
        %v372 = vunpack.c.h.bf16 %v354
        %v373 = vunpack.c.l.bf16 %v355
        %v374 = vunpack.c.h.bf16 %v355
        %v375 = vunpack.c.l.bf16 %v356
        %v376 = vunpack.c.h.bf16 %v356
        %v377 = vunpack.c.l.bf16 %v357
        %v378 = vunpack.c.h.bf16 %v357
        %v379 = vunpack.c.l.bf16 %v358
        %v380 = vunpack.c.h.bf16 %v358
        %v381 = vunpack.c.l.bf16 %v359
        %v382 = vunpack.c.h.bf16 %v359
        %v383 = vunpack.c.l.bf16 %v360
        %v384 = vunpack.c.h.bf16 %v360
        %v385 = vperm.slane %v381, 0
        %v386 = vperm.slane %v382, 0
        %v387 = vperm.slane %v383, 0
        %v388 = vperm.slane %v384, 0
        %v389 = vmul.f32 %v365, %v385
        %v390 = vmul.f32 %v366, %v386
        %v391 = vmul.f32 %v367, %v387
        %v392 = vmul.f32 %v368, %v388
        %v393 = vmul.f32 %v369, %v385
        %v394 = vmul.f32 %v370, %v386
        %v395 = vmul.f32 %v371, %v387
        %v396 = vmul.f32 %v372, %v388
        %v397 = vmul.f32 %v373, %v385
        %v398 = vmul.f32 %v374, %v386
        %v399 = vmul.f32 %v375, %v387
        %v400 = vmul.f32 %v376, %v388
        %v401 = vmul.f32 %v377, %v385
        %v402 = vmul.f32 %v378, %v386
        %v403 = vmul.f32 %v379, %v387
        %v404 = vmul.f32 %v380, %v388
        %v405 = vadd.f32 %v389, 0.0
        %v406 = vadd.f32 %v390, 0.0
        %v407 = vadd.f32 %v391, 0.0
        %v408 = vadd.f32 %v392, 0.0
        %v409 = vadd.f32 %v393, 0.0
        %v410 = vadd.f32 %v394, 0.0
        %v411 = vadd.f32 %v395, 0.0
        %v412 = vadd.f32 %v396, 0.0
        %v413 = vadd.f32 %v397, 0.0
        %v414 = vadd.f32 %v398, 0.0
        %v415 = vadd.f32 %v399, 0.0
        %v416 = vadd.f32 %v400, 0.0
        %v417 = vadd.f32 %v401, 0.0
        %v418 = vadd.f32 %v402, 0.0
        %v419 = vadd.f32 %v403, 0.0
        %v420 = vadd.f32 %v404, 0.0
        %v421 = vunpack.c.l.bf16 %v361
        %v422 = vunpack.c.h.bf16 %v361
        %v423 = vunpack.c.l.bf16 %v362
        %v424 = vunpack.c.h.bf16 %v362
        %v425 = vperm.slane %v421, 0
        %v426 = vperm.slane %v422, 0
        %v427 = vperm.slane %v423, 0
        %v428 = vperm.slane %v424, 0
        %v429 = vmul.f32 %v365, %v425
        %v430 = vmul.f32 %v366, %v426
        %v431 = vmul.f32 %v367, %v427
        %v432 = vmul.f32 %v368, %v428
        %v433 = vmul.f32 %v369, %v425
        %v434 = vmul.f32 %v370, %v426
        %v435 = vmul.f32 %v371, %v427
        %v436 = vmul.f32 %v372, %v428
        %v437 = vmul.f32 %v373, %v425
        %v438 = vmul.f32 %v374, %v426
        %v439 = vmul.f32 %v375, %v427
        %v440 = vmul.f32 %v376, %v428
        %v441 = vmul.f32 %v377, %v425
        %v442 = vmul.f32 %v378, %v426
        %v443 = vmul.f32 %v379, %v427
        %v444 = vmul.f32 %v380, %v428
        %v445 = vadd.f32 %v429, 0.0
        %v446 = vadd.f32 %v430, 0.0
        %v447 = vadd.f32 %v431, 0.0
        %v448 = vadd.f32 %v432, 0.0
        %v449 = vadd.f32 %v433, 0.0
        %v450 = vadd.f32 %v434, 0.0
        %v451 = vadd.f32 %v435, 0.0
        %v452 = vadd.f32 %v436, 0.0
        %v453 = vadd.f32 %v437, 0.0
        %v454 = vadd.f32 %v438, 0.0
        %v455 = vadd.f32 %v439, 0.0
        %v456 = vadd.f32 %v440, 0.0
        %v457 = vadd.f32 %v441, 0.0
        %v458 = vadd.f32 %v442, 0.0
        %v459 = vadd.f32 %v443, 0.0
        %v460 = vadd.f32 %v444, 0.0
        %v461 = vunpack.c.l.bf16 %v363
        %v462 = vunpack.c.h.bf16 %v363
        %v463 = vunpack.c.l.bf16 %v364
        %v464 = vunpack.c.h.bf16 %v364
        %v465 = vperm.slane %v461, 0
        %v466 = vperm.slane %v462, 0
        %v467 = vperm.slane %v463, 0
        %v468 = vperm.slane %v464, 0
        %v469 = vmul.f32 %v365, %v465
        %v470 = vmul.f32 %v366, %v466
        %v471 = vmul.f32 %v367, %v467
        %v472 = vmul.f32 %v368, %v468
        %v473 = vmul.f32 %v369, %v465
        %v474 = vmul.f32 %v370, %v466
        %v475 = vmul.f32 %v371, %v467
        %v476 = vmul.f32 %v372, %v468
        %v477 = vmul.f32 %v373, %v465
        %v478 = vmul.f32 %v374, %v466
        %v479 = vmul.f32 %v375, %v467
        %v480 = vmul.f32 %v376, %v468
        %v481 = vmul.f32 %v377, %v465
        %v482 = vmul.f32 %v378, %v466
        %v483 = vmul.f32 %v379, %v467
        %v484 = vmul.f32 %v380, %v468
        %v485 = vadd.f32 %v469, 0.0
        %v486 = vadd.f32 %v470, 0.0
        %v487 = vadd.f32 %v471, 0.0
        %v488 = vadd.f32 %v472, 0.0
        %v489 = vadd.f32 %v473, 0.0
        %v490 = vadd.f32 %v474, 0.0
        %v491 = vadd.f32 %v475, 0.0
        %v492 = vadd.f32 %v476, 0.0
        %v493 = vadd.f32 %v477, 0.0
        %v494 = vadd.f32 %v478, 0.0
        %v495 = vadd.f32 %v479, 0.0
        %v496 = vadd.f32 %v480, 0.0
        %v497 = vadd.f32 %v481, 0.0
        %v498 = vadd.f32 %v482, 0.0
        %v499 = vadd.f32 %v483, 0.0
        %v500 = vadd.f32 %v484, 0.0
        %v501 = vperm.slane %v381, 1
        %v502 = vperm.slane %v382, 1
        %v503 = vperm.slane %v383, 1
        %v504 = vperm.slane %v384, 1
        %v505 = vmul.f32 %v365, %v501
        %v506 = vmul.f32 %v366, %v502
        %v507 = vmul.f32 %v367, %v503
        %v508 = vmul.f32 %v368, %v504
        %v509 = vmul.f32 %v369, %v501
        %v510 = vmul.f32 %v370, %v502
        %v511 = vmul.f32 %v371, %v503
        %v512 = vmul.f32 %v372, %v504
        %v513 = vmul.f32 %v373, %v501
        %v514 = vmul.f32 %v374, %v502
        %v515 = vmul.f32 %v375, %v503
        %v516 = vmul.f32 %v376, %v504
        %v517 = vmul.f32 %v377, %v501
        %v518 = vmul.f32 %v378, %v502
        %v519 = vmul.f32 %v379, %v503
        %v520 = vmul.f32 %v380, %v504
        %v537 = vrot.slane %v505, 1
        %v538 = vrot.slane %v506, 1
        %v539 = vrot.slane %v507, 1
        %v540 = vrot.slane %v508, 1
        %v541 = vrot.slane %v509, 1
        %v542 = vrot.slane %v510, 1
        %v543 = vrot.slane %v511, 1
        %v544 = vrot.slane %v512, 1
        %v545 = vrot.slane %v513, 1
        %v546 = vrot.slane %v514, 1
        %v547 = vrot.slane %v515, 1
        %v548 = vrot.slane %v516, 1
        %v549 = vrot.slane %v517, 1
        %v550 = vrot.slane %v518, 1
        %v551 = vrot.slane %v519, 1
        %v552 = vrot.slane %v520, 1
        %v569 = vadd.f32 %v405, %v537
        %v570 = vadd.f32 %v406, %v538
        %v571 = vadd.f32 %v407, %v539
        %v572 = vadd.f32 %v408, %v540
        %v573 = vadd.f32 %v409, %v541
        %v574 = vadd.f32 %v410, %v542
        %v575 = vadd.f32 %v411, %v543
        %v576 = vadd.f32 %v412, %v544
        %v577 = vadd.f32 %v413, %v545
        %v578 = vadd.f32 %v414, %v546
        %v579 = vadd.f32 %v415, %v547
        %v580 = vadd.f32 %v416, %v548
        %v581 = vadd.f32 %v417, %v549
        %v582 = vadd.f32 %v418, %v550
        %v583 = vadd.f32 %v419, %v551
        %v584 = vadd.f32 %v420, %v552
        %v585 = vperm.slane %v421, 1
        %v586 = vperm.slane %v422, 1
        %v587 = vperm.slane %v423, 1
        %v588 = vperm.slane %v424, 1
        %v589 = vmul.f32 %v365, %v585
        %v590 = vmul.f32 %v366, %v586
        %v591 = vmul.f32 %v367, %v587
        %v592 = vmul.f32 %v368, %v588
        %v593 = vmul.f32 %v369, %v585
        %v594 = vmul.f32 %v370, %v586
        %v595 = vmul.f32 %v371, %v587
        %v596 = vmul.f32 %v372, %v588
        %v597 = vmul.f32 %v373, %v585
        %v598 = vmul.f32 %v374, %v586
        %v599 = vmul.f32 %v375, %v587
        %v600 = vmul.f32 %v376, %v588
        %v601 = vmul.f32 %v377, %v585
        %v602 = vmul.f32 %v378, %v586
        %v603 = vmul.f32 %v379, %v587
        %v604 = vmul.f32 %v380, %v588
        %v621 = vrot.slane %v589, 1
        %v622 = vrot.slane %v590, 1
        %v623 = vrot.slane %v591, 1
        %v624 = vrot.slane %v592, 1
        %v625 = vrot.slane %v593, 1
        %v626 = vrot.slane %v594, 1
        %v627 = vrot.slane %v595, 1
        %v628 = vrot.slane %v596, 1
        %v629 = vrot.slane %v597, 1
        %v630 = vrot.slane %v598, 1
        %v631 = vrot.slane %v599, 1
        %v632 = vrot.slane %v600, 1
        %v633 = vrot.slane %v601, 1
        %v634 = vrot.slane %v602, 1
        %v635 = vrot.slane %v603, 1
        %v636 = vrot.slane %v604, 1
        %v653 = vadd.f32 %v445, %v621
        %v654 = vadd.f32 %v446, %v622
        %v655 = vadd.f32 %v447, %v623
        %v656 = vadd.f32 %v448, %v624
        %v657 = vadd.f32 %v449, %v625
        %v658 = vadd.f32 %v450, %v626
        %v659 = vadd.f32 %v451, %v627
        %v660 = vadd.f32 %v452, %v628
        %v661 = vadd.f32 %v453, %v629
        %v662 = vadd.f32 %v454, %v630
        %v663 = vadd.f32 %v455, %v631
        %v664 = vadd.f32 %v456, %v632
        %v665 = vadd.f32 %v457, %v633
        %v666 = vadd.f32 %v458, %v634
        %v667 = vadd.f32 %v459, %v635
        %v668 = vadd.f32 %v460, %v636
        %v669 = vperm.slane %v461, 1
        %v670 = vperm.slane %v462, 1
        %v671 = vperm.slane %v463, 1
        %v672 = vperm.slane %v464, 1
        %v673 = vmul.f32 %v365, %v669
        %v674 = vmul.f32 %v366, %v670
        %v675 = vmul.f32 %v367, %v671
        %v676 = vmul.f32 %v368, %v672
        %v677 = vmul.f32 %v369, %v669
        %v678 = vmul.f32 %v370, %v670
        %v679 = vmul.f32 %v371, %v671
        %v680 = vmul.f32 %v372, %v672
        %v681 = vmul.f32 %v373, %v669
        %v682 = vmul.f32 %v374, %v670
        %v683 = vmul.f32 %v375, %v671
        %v684 = vmul.f32 %v376, %v672
        %v685 = vmul.f32 %v377, %v669
        %v686 = vmul.f32 %v378, %v670
        %v687 = vmul.f32 %v379, %v671
        %v688 = vmul.f32 %v380, %v672
        %v705 = vrot.slane %v673, 1
        %v706 = vrot.slane %v674, 1
        %v707 = vrot.slane %v675, 1
        %v708 = vrot.slane %v676, 1
        %v709 = vrot.slane %v677, 1
        %v710 = vrot.slane %v678, 1
        %v711 = vrot.slane %v679, 1
        %v712 = vrot.slane %v680, 1
        %v713 = vrot.slane %v681, 1
        %v714 = vrot.slane %v682, 1
        %v715 = vrot.slane %v683, 1
        %v716 = vrot.slane %v684, 1
        %v717 = vrot.slane %v685, 1
        %v718 = vrot.slane %v686, 1
        %v719 = vrot.slane %v687, 1
        %v720 = vrot.slane %v688, 1
        %v737 = vadd.f32 %v485, %v705
        %v738 = vadd.f32 %v486, %v706
        %v739 = vadd.f32 %v487, %v707
        %v740 = vadd.f32 %v488, %v708
        %v741 = vadd.f32 %v489, %v709
        %v742 = vadd.f32 %v490, %v710
        %v743 = vadd.f32 %v491, %v711
        %v744 = vadd.f32 %v492, %v712
        %v745 = vadd.f32 %v493, %v713
        %v746 = vadd.f32 %v494, %v714
        %v747 = vadd.f32 %v495, %v715
        %v748 = vadd.f32 %v496, %v716
        %v749 = vadd.f32 %v497, %v717
        %v750 = vadd.f32 %v498, %v718
        %v751 = vadd.f32 %v499, %v719
        %v752 = vadd.f32 %v500, %v720
        %v753 = vperm.slane %v381, 2
        %v754 = vperm.slane %v382, 2
        %v755 = vperm.slane %v383, 2
        %v756 = vperm.slane %v384, 2
        %v757 = vmul.f32 %v365, %v753
        %v758 = vmul.f32 %v366, %v754
        %v759 = vmul.f32 %v367, %v755
        %v760 = vmul.f32 %v368, %v756
        %v761 = vmul.f32 %v369, %v753
        %v762 = vmul.f32 %v370, %v754
        %v763 = vmul.f32 %v371, %v755
        %v764 = vmul.f32 %v372, %v756
        %v765 = vmul.f32 %v373, %v753
        %v766 = vmul.f32 %v374, %v754
        %v767 = vmul.f32 %v375, %v755
        %v768 = vmul.f32 %v376, %v756
        %v769 = vmul.f32 %v377, %v753
        %v770 = vmul.f32 %v378, %v754
        %v771 = vmul.f32 %v379, %v755
        %v772 = vmul.f32 %v380, %v756
        %v789 = vrot.slane %v757, 2
        %v790 = vrot.slane %v758, 2
        %v791 = vrot.slane %v759, 2
        %v792 = vrot.slane %v760, 2
        %v793 = vrot.slane %v761, 2
        %v794 = vrot.slane %v762, 2
        %v795 = vrot.slane %v763, 2
        %v796 = vrot.slane %v764, 2
        %v797 = vrot.slane %v765, 2
        %v798 = vrot.slane %v766, 2
        %v799 = vrot.slane %v767, 2
        %v800 = vrot.slane %v768, 2
        %v801 = vrot.slane %v769, 2
        %v802 = vrot.slane %v770, 2
        %v803 = vrot.slane %v771, 2
        %v804 = vrot.slane %v772, 2
        %v821 = vadd.f32 %v569, %v789
        %v822 = vadd.f32 %v570, %v790
        %v823 = vadd.f32 %v571, %v791
        %v824 = vadd.f32 %v572, %v792
        %v825 = vadd.f32 %v573, %v793
        %v826 = vadd.f32 %v574, %v794
        %v827 = vadd.f32 %v575, %v795
        %v828 = vadd.f32 %v576, %v796
        %v829 = vadd.f32 %v577, %v797
        %v830 = vadd.f32 %v578, %v798
        %v831 = vadd.f32 %v579, %v799
        %v832 = vadd.f32 %v580, %v800
        %v833 = vadd.f32 %v581, %v801
        %v834 = vadd.f32 %v582, %v802
        %v835 = vadd.f32 %v583, %v803
        %v836 = vadd.f32 %v584, %v804
        %v837 = vperm.slane %v421, 2
        %v838 = vperm.slane %v422, 2
        %v839 = vperm.slane %v423, 2
        %v840 = vperm.slane %v424, 2
        %v841 = vmul.f32 %v365, %v837
        %v842 = vmul.f32 %v366, %v838
        %v843 = vmul.f32 %v367, %v839
        %v844 = vmul.f32 %v368, %v840
        %v845 = vmul.f32 %v369, %v837
        %v846 = vmul.f32 %v370, %v838
        %v847 = vmul.f32 %v371, %v839
        %v848 = vmul.f32 %v372, %v840
        %v849 = vmul.f32 %v373, %v837
        %v850 = vmul.f32 %v374, %v838
        %v851 = vmul.f32 %v375, %v839
        %v852 = vmul.f32 %v376, %v840
        %v853 = vmul.f32 %v377, %v837
        %v854 = vmul.f32 %v378, %v838
        %v855 = vmul.f32 %v379, %v839
        %v856 = vmul.f32 %v380, %v840
        %v873 = vrot.slane %v841, 2
        %v874 = vrot.slane %v842, 2
        %v875 = vrot.slane %v843, 2
        %v876 = vrot.slane %v844, 2
        %v877 = vrot.slane %v845, 2
        %v878 = vrot.slane %v846, 2
        %v879 = vrot.slane %v847, 2
        %v880 = vrot.slane %v848, 2
        %v881 = vrot.slane %v849, 2
        %v882 = vrot.slane %v850, 2
        %v883 = vrot.slane %v851, 2
        %v884 = vrot.slane %v852, 2
        %v885 = vrot.slane %v853, 2
        %v886 = vrot.slane %v854, 2
        %v887 = vrot.slane %v855, 2
        %v888 = vrot.slane %v856, 2
        %v905 = vadd.f32 %v653, %v873
        %v906 = vadd.f32 %v654, %v874
        %v907 = vadd.f32 %v655, %v875
        %v908 = vadd.f32 %v656, %v876
        %v909 = vadd.f32 %v657, %v877
        %v910 = vadd.f32 %v658, %v878
        %v911 = vadd.f32 %v659, %v879
        %v912 = vadd.f32 %v660, %v880
        %v913 = vadd.f32 %v661, %v881
        %v914 = vadd.f32 %v662, %v882
        %v915 = vadd.f32 %v663, %v883
        %v916 = vadd.f32 %v664, %v884
        %v917 = vadd.f32 %v665, %v885
        %v918 = vadd.f32 %v666, %v886
        %v919 = vadd.f32 %v667, %v887
        %v920 = vadd.f32 %v668, %v888
        %v921 = vperm.slane %v461, 2
        %v922 = vperm.slane %v462, 2
        %v923 = vperm.slane %v463, 2
        %v924 = vperm.slane %v464, 2
        %v925 = vmul.f32 %v365, %v921
        %v926 = vmul.f32 %v366, %v922
        %v927 = vmul.f32 %v367, %v923
        %v928 = vmul.f32 %v368, %v924
        %v929 = vmul.f32 %v369, %v921
        %v930 = vmul.f32 %v370, %v922
        %v931 = vmul.f32 %v371, %v923
        %v932 = vmul.f32 %v372, %v924
        %v933 = vmul.f32 %v373, %v921
        %v934 = vmul.f32 %v374, %v922
        %v935 = vmul.f32 %v375, %v923
        %v936 = vmul.f32 %v376, %v924
        %v937 = vmul.f32 %v377, %v921
        %v938 = vmul.f32 %v378, %v922
        %v939 = vmul.f32 %v379, %v923
        %v940 = vmul.f32 %v380, %v924
        %v957 = vrot.slane %v925, 2
        %v958 = vrot.slane %v926, 2
        %v959 = vrot.slane %v927, 2
        %v960 = vrot.slane %v928, 2
        %v961 = vrot.slane %v929, 2
        %v962 = vrot.slane %v930, 2
        %v963 = vrot.slane %v931, 2
        %v964 = vrot.slane %v932, 2
        %v965 = vrot.slane %v933, 2
        %v966 = vrot.slane %v934, 2
        %v967 = vrot.slane %v935, 2
        %v968 = vrot.slane %v936, 2
        %v969 = vrot.slane %v937, 2
        %v970 = vrot.slane %v938, 2
        %v971 = vrot.slane %v939, 2
        %v972 = vrot.slane %v940, 2
        %v989 = vadd.f32 %v737, %v957
        %v990 = vadd.f32 %v738, %v958
        %v991 = vadd.f32 %v739, %v959
        %v992 = vadd.f32 %v740, %v960
        %v993 = vadd.f32 %v741, %v961
        %v994 = vadd.f32 %v742, %v962
        %v995 = vadd.f32 %v743, %v963
        %v996 = vadd.f32 %v744, %v964
        %v997 = vadd.f32 %v745, %v965
        %v998 = vadd.f32 %v746, %v966
        %v999 = vadd.f32 %v747, %v967
        %v1000 = vadd.f32 %v748, %v968
        %v1001 = vadd.f32 %v749, %v969
        %v1002 = vadd.f32 %v750, %v970
        %v1003 = vadd.f32 %v751, %v971
        %v1004 = vadd.f32 %v752, %v972
        %v1005 = vperm.slane %v381, 3
        %v1006 = vperm.slane %v382, 3
        %v1007 = vperm.slane %v383, 3
        %v1008 = vperm.slane %v384, 3
        %v1009 = vmul.f32 %v365, %v1005
        %v1010 = vmul.f32 %v366, %v1006
        %v1011 = vmul.f32 %v367, %v1007
        %v1012 = vmul.f32 %v368, %v1008
        %v1013 = vmul.f32 %v369, %v1005
        %v1014 = vmul.f32 %v370, %v1006
        %v1015 = vmul.f32 %v371, %v1007
        %v1016 = vmul.f32 %v372, %v1008
        %v1017 = vmul.f32 %v373, %v1005
        %v1018 = vmul.f32 %v374, %v1006
        %v1019 = vmul.f32 %v375, %v1007
        %v1020 = vmul.f32 %v376, %v1008
        %v1021 = vmul.f32 %v377, %v1005
        %v1022 = vmul.f32 %v378, %v1006
        %v1023 = vmul.f32 %v379, %v1007
        %v1024 = vmul.f32 %v380, %v1008
        %v1041 = vrot.slane %v1009, 3
        %v1042 = vrot.slane %v1010, 3
        %v1043 = vrot.slane %v1011, 3
        %v1044 = vrot.slane %v1012, 3
        %v1045 = vrot.slane %v1013, 3
        %v1046 = vrot.slane %v1014, 3
        %v1047 = vrot.slane %v1015, 3
        %v1048 = vrot.slane %v1016, 3
        %v1049 = vrot.slane %v1017, 3
        %v1050 = vrot.slane %v1018, 3
        %v1051 = vrot.slane %v1019, 3
        %v1052 = vrot.slane %v1020, 3
        %v1053 = vrot.slane %v1021, 3
        %v1054 = vrot.slane %v1022, 3
        %v1055 = vrot.slane %v1023, 3
        %v1056 = vrot.slane %v1024, 3
        %v1073 = vadd.f32 %v821, %v1041
        %v1074 = vadd.f32 %v822, %v1042
        %v1075 = vadd.f32 %v823, %v1043
        %v1076 = vadd.f32 %v824, %v1044
        %v1077 = vadd.f32 %v825, %v1045
        %v1078 = vadd.f32 %v826, %v1046
        %v1079 = vadd.f32 %v827, %v1047
        %v1080 = vadd.f32 %v828, %v1048
        %v1081 = vadd.f32 %v829, %v1049
        %v1082 = vadd.f32 %v830, %v1050
        %v1083 = vadd.f32 %v831, %v1051
        %v1084 = vadd.f32 %v832, %v1052
        %v1085 = vadd.f32 %v833, %v1053
        %v1086 = vadd.f32 %v834, %v1054
        %v1087 = vadd.f32 %v835, %v1055
        %v1088 = vadd.f32 %v836, %v1056
        %v1089 = vperm.slane %v421, 3
        %v1090 = vperm.slane %v422, 3
        %v1091 = vperm.slane %v423, 3
        %v1092 = vperm.slane %v424, 3
        %v1093 = vmul.f32 %v365, %v1089
        %v1094 = vmul.f32 %v366, %v1090
        %v1095 = vmul.f32 %v367, %v1091
        %v1096 = vmul.f32 %v368, %v1092
        %v1097 = vmul.f32 %v369, %v1089
        %v1098 = vmul.f32 %v370, %v1090
        %v1099 = vmul.f32 %v371, %v1091
        %v1100 = vmul.f32 %v372, %v1092
        %v1101 = vmul.f32 %v373, %v1089
        %v1102 = vmul.f32 %v374, %v1090
        %v1103 = vmul.f32 %v375, %v1091
        %v1104 = vmul.f32 %v376, %v1092
        %v1105 = vmul.f32 %v377, %v1089
        %v1106 = vmul.f32 %v378, %v1090
        %v1107 = vmul.f32 %v379, %v1091
        %v1108 = vmul.f32 %v380, %v1092
        %v1125 = vrot.slane %v1093, 3
        %v1126 = vrot.slane %v1094, 3
        %v1127 = vrot.slane %v1095, 3
        %v1128 = vrot.slane %v1096, 3
        %v1129 = vrot.slane %v1097, 3
        %v1130 = vrot.slane %v1098, 3
        %v1131 = vrot.slane %v1099, 3
        %v1132 = vrot.slane %v1100, 3
        %v1133 = vrot.slane %v1101, 3
        %v1134 = vrot.slane %v1102, 3
        %v1135 = vrot.slane %v1103, 3
        %v1136 = vrot.slane %v1104, 3
        %v1137 = vrot.slane %v1105, 3
        %v1138 = vrot.slane %v1106, 3
        %v1139 = vrot.slane %v1107, 3
        %v1140 = vrot.slane %v1108, 3
        %v1157 = vadd.f32 %v905, %v1125
        %v1158 = vadd.f32 %v906, %v1126
        %v1159 = vadd.f32 %v907, %v1127
        %v1160 = vadd.f32 %v908, %v1128
        %v1161 = vadd.f32 %v909, %v1129
        %v1162 = vadd.f32 %v910, %v1130
        %v1163 = vadd.f32 %v911, %v1131
        %v1164 = vadd.f32 %v912, %v1132
        %v1165 = vadd.f32 %v913, %v1133
        %v1166 = vadd.f32 %v914, %v1134
        %v1167 = vadd.f32 %v915, %v1135
        %v1168 = vadd.f32 %v916, %v1136
        %v1169 = vadd.f32 %v917, %v1137
        %v1170 = vadd.f32 %v918, %v1138
        %v1171 = vadd.f32 %v919, %v1139
        %v1172 = vadd.f32 %v920, %v1140
        %v1173 = vperm.slane %v461, 3
        %v1174 = vperm.slane %v462, 3
        %v1175 = vperm.slane %v463, 3
        %v1176 = vperm.slane %v464, 3
        %v1177 = vmul.f32 %v365, %v1173
        %v1178 = vmul.f32 %v366, %v1174
        %v1179 = vmul.f32 %v367, %v1175
        %v1180 = vmul.f32 %v368, %v1176
        %v1181 = vmul.f32 %v369, %v1173
        %v1182 = vmul.f32 %v370, %v1174
        %v1183 = vmul.f32 %v371, %v1175
        %v1184 = vmul.f32 %v372, %v1176
        %v1185 = vmul.f32 %v373, %v1173
        %v1186 = vmul.f32 %v374, %v1174
        %v1187 = vmul.f32 %v375, %v1175
        %v1188 = vmul.f32 %v376, %v1176
        %v1189 = vmul.f32 %v377, %v1173
        %v1190 = vmul.f32 %v378, %v1174
        %v1191 = vmul.f32 %v379, %v1175
        %v1192 = vmul.f32 %v380, %v1176
        %v1209 = vrot.slane %v1177, 3
        %v1210 = vrot.slane %v1178, 3
        %v1211 = vrot.slane %v1179, 3
        %v1212 = vrot.slane %v1180, 3
        %v1213 = vrot.slane %v1181, 3
        %v1214 = vrot.slane %v1182, 3
        %v1215 = vrot.slane %v1183, 3
        %v1216 = vrot.slane %v1184, 3
        %v1217 = vrot.slane %v1185, 3
        %v1218 = vrot.slane %v1186, 3
        %v1219 = vrot.slane %v1187, 3
        %v1220 = vrot.slane %v1188, 3
        %v1221 = vrot.slane %v1189, 3
        %v1222 = vrot.slane %v1190, 3
        %v1223 = vrot.slane %v1191, 3
        %v1224 = vrot.slane %v1192, 3
        %v1241 = vadd.f32 %v989, %v1209
        %v1242 = vadd.f32 %v990, %v1210
        %v1243 = vadd.f32 %v991, %v1211
        %v1244 = vadd.f32 %v992, %v1212
        %v1245 = vadd.f32 %v993, %v1213
        %v1246 = vadd.f32 %v994, %v1214
        %v1247 = vadd.f32 %v995, %v1215
        %v1248 = vadd.f32 %v996, %v1216
        %v1249 = vadd.f32 %v997, %v1217
        %v1250 = vadd.f32 %v998, %v1218
        %v1251 = vadd.f32 %v999, %v1219
        %v1252 = vadd.f32 %v1000, %v1220
        %v1253 = vadd.f32 %v1001, %v1221
        %v1254 = vadd.f32 %v1002, %v1222
        %v1255 = vadd.f32 %v1003, %v1223
        %v1256 = vadd.f32 %v1004, %v1224
        %v1257 = vperm.slane %v381, 4
        %v1258 = vperm.slane %v382, 4
        %v1259 = vperm.slane %v383, 4
        %v1260 = vperm.slane %v384, 4
        %v1261 = vmul.f32 %v365, %v1257
        %v1262 = vmul.f32 %v366, %v1258
        %v1263 = vmul.f32 %v367, %v1259
        %v1264 = vmul.f32 %v368, %v1260
        %v1265 = vmul.f32 %v369, %v1257
        %v1266 = vmul.f32 %v370, %v1258
        %v1267 = vmul.f32 %v371, %v1259
        %v1268 = vmul.f32 %v372, %v1260
        %v1269 = vmul.f32 %v373, %v1257
        %v1270 = vmul.f32 %v374, %v1258
        %v1271 = vmul.f32 %v375, %v1259
        %v1272 = vmul.f32 %v376, %v1260
        %v1273 = vmul.f32 %v377, %v1257
        %v1274 = vmul.f32 %v378, %v1258
        %v1275 = vmul.f32 %v379, %v1259
        %v1276 = vmul.f32 %v380, %v1260
        %v1293 = vrot.slane %v1261, 4
        %v1294 = vrot.slane %v1262, 4
        %v1295 = vrot.slane %v1263, 4
        %v1296 = vrot.slane %v1264, 4
        %v1297 = vrot.slane %v1265, 4
        %v1298 = vrot.slane %v1266, 4
        %v1299 = vrot.slane %v1267, 4
        %v1300 = vrot.slane %v1268, 4
        %v1301 = vrot.slane %v1269, 4
        %v1302 = vrot.slane %v1270, 4
        %v1303 = vrot.slane %v1271, 4
        %v1304 = vrot.slane %v1272, 4
        %v1305 = vrot.slane %v1273, 4
        %v1306 = vrot.slane %v1274, 4
        %v1307 = vrot.slane %v1275, 4
        %v1308 = vrot.slane %v1276, 4
        %v1325 = vadd.f32 %v1073, %v1293
        %v1326 = vadd.f32 %v1074, %v1294
        %v1327 = vadd.f32 %v1075, %v1295
        %v1328 = vadd.f32 %v1076, %v1296
        %v1329 = vadd.f32 %v1077, %v1297
        %v1330 = vadd.f32 %v1078, %v1298
        %v1331 = vadd.f32 %v1079, %v1299
        %v1332 = vadd.f32 %v1080, %v1300
        %v1333 = vadd.f32 %v1081, %v1301
        %v1334 = vadd.f32 %v1082, %v1302
        %v1335 = vadd.f32 %v1083, %v1303
        %v1336 = vadd.f32 %v1084, %v1304
        %v1337 = vadd.f32 %v1085, %v1305
        %v1338 = vadd.f32 %v1086, %v1306
        %v1339 = vadd.f32 %v1087, %v1307
        %v1340 = vadd.f32 %v1088, %v1308
        %v1341 = vperm.slane %v421, 4
        %v1342 = vperm.slane %v422, 4
        %v1343 = vperm.slane %v423, 4
        %v1344 = vperm.slane %v424, 4
        %v1345 = vmul.f32 %v365, %v1341
        %v1346 = vmul.f32 %v366, %v1342
        %v1347 = vmul.f32 %v367, %v1343
        %v1348 = vmul.f32 %v368, %v1344
        %v1349 = vmul.f32 %v369, %v1341
        %v1350 = vmul.f32 %v370, %v1342
        %v1351 = vmul.f32 %v371, %v1343
        %v1352 = vmul.f32 %v372, %v1344
        %v1353 = vmul.f32 %v373, %v1341
        %v1354 = vmul.f32 %v374, %v1342
        %v1355 = vmul.f32 %v375, %v1343
        %v1356 = vmul.f32 %v376, %v1344
        %v1357 = vmul.f32 %v377, %v1341
        %v1358 = vmul.f32 %v378, %v1342
        %v1359 = vmul.f32 %v379, %v1343
        %v1360 = vmul.f32 %v380, %v1344
        %v1377 = vrot.slane %v1345, 4
        %v1378 = vrot.slane %v1346, 4
        %v1379 = vrot.slane %v1347, 4
        %v1380 = vrot.slane %v1348, 4
        %v1381 = vrot.slane %v1349, 4
        %v1382 = vrot.slane %v1350, 4
        %v1383 = vrot.slane %v1351, 4
        %v1384 = vrot.slane %v1352, 4
        %v1385 = vrot.slane %v1353, 4
        %v1386 = vrot.slane %v1354, 4
        %v1387 = vrot.slane %v1355, 4
        %v1388 = vrot.slane %v1356, 4
        %v1389 = vrot.slane %v1357, 4
        %v1390 = vrot.slane %v1358, 4
        %v1391 = vrot.slane %v1359, 4
        %v1392 = vrot.slane %v1360, 4
        %v1409 = vadd.f32 %v1157, %v1377
        %v1410 = vadd.f32 %v1158, %v1378
        %v1411 = vadd.f32 %v1159, %v1379
        %v1412 = vadd.f32 %v1160, %v1380
        %v1413 = vadd.f32 %v1161, %v1381
        %v1414 = vadd.f32 %v1162, %v1382
        %v1415 = vadd.f32 %v1163, %v1383
        %v1416 = vadd.f32 %v1164, %v1384
        %v1417 = vadd.f32 %v1165, %v1385
        %v1418 = vadd.f32 %v1166, %v1386
        %v1419 = vadd.f32 %v1167, %v1387
        %v1420 = vadd.f32 %v1168, %v1388
        %v1421 = vadd.f32 %v1169, %v1389
        %v1422 = vadd.f32 %v1170, %v1390
        %v1423 = vadd.f32 %v1171, %v1391
        %v1424 = vadd.f32 %v1172, %v1392
        %v1425 = vperm.slane %v461, 4
        %v1426 = vperm.slane %v462, 4
        %v1427 = vperm.slane %v463, 4
        %v1428 = vperm.slane %v464, 4
        %v1429 = vmul.f32 %v365, %v1425
        %v1430 = vmul.f32 %v366, %v1426
        %v1431 = vmul.f32 %v367, %v1427
        %v1432 = vmul.f32 %v368, %v1428
        %v1433 = vmul.f32 %v369, %v1425
        %v1434 = vmul.f32 %v370, %v1426
        %v1435 = vmul.f32 %v371, %v1427
        %v1436 = vmul.f32 %v372, %v1428
        %v1437 = vmul.f32 %v373, %v1425
        %v1438 = vmul.f32 %v374, %v1426
        %v1439 = vmul.f32 %v375, %v1427
        %v1440 = vmul.f32 %v376, %v1428
        %v1441 = vmul.f32 %v377, %v1425
        %v1442 = vmul.f32 %v378, %v1426
        %v1443 = vmul.f32 %v379, %v1427
        %v1444 = vmul.f32 %v380, %v1428
        %v1461 = vrot.slane %v1429, 4
        %v1462 = vrot.slane %v1430, 4
        %v1463 = vrot.slane %v1431, 4
        %v1464 = vrot.slane %v1432, 4
        %v1465 = vrot.slane %v1433, 4
        %v1466 = vrot.slane %v1434, 4
        %v1467 = vrot.slane %v1435, 4
        %v1468 = vrot.slane %v1436, 4
        %v1469 = vrot.slane %v1437, 4
        %v1470 = vrot.slane %v1438, 4
        %v1471 = vrot.slane %v1439, 4
        %v1472 = vrot.slane %v1440, 4
        %v1473 = vrot.slane %v1441, 4
        %v1474 = vrot.slane %v1442, 4
        %v1475 = vrot.slane %v1443, 4
        %v1476 = vrot.slane %v1444, 4
        %v1493 = vadd.f32 %v1241, %v1461
        %v1494 = vadd.f32 %v1242, %v1462
        %v1495 = vadd.f32 %v1243, %v1463
        %v1496 = vadd.f32 %v1244, %v1464
        %v1497 = vadd.f32 %v1245, %v1465
        %v1498 = vadd.f32 %v1246, %v1466
        %v1499 = vadd.f32 %v1247, %v1467
        %v1500 = vadd.f32 %v1248, %v1468
        %v1501 = vadd.f32 %v1249, %v1469
        %v1502 = vadd.f32 %v1250, %v1470
        %v1503 = vadd.f32 %v1251, %v1471
        %v1504 = vadd.f32 %v1252, %v1472
        %v1505 = vadd.f32 %v1253, %v1473
        %v1506 = vadd.f32 %v1254, %v1474
        %v1507 = vadd.f32 %v1255, %v1475
        %v1508 = vadd.f32 %v1256, %v1476
        %v1509 = vperm.slane %v381, 5
        %v1510 = vperm.slane %v382, 5
        %v1511 = vperm.slane %v383, 5
        %v1512 = vperm.slane %v384, 5
        %v1513 = vmul.f32 %v365, %v1509
        %v1514 = vmul.f32 %v366, %v1510
        %v1515 = vmul.f32 %v367, %v1511
        %v1516 = vmul.f32 %v368, %v1512
        %v1517 = vmul.f32 %v369, %v1509
        %v1518 = vmul.f32 %v370, %v1510
        %v1519 = vmul.f32 %v371, %v1511
        %v1520 = vmul.f32 %v372, %v1512
        %v1521 = vmul.f32 %v373, %v1509
        %v1522 = vmul.f32 %v374, %v1510
        %v1523 = vmul.f32 %v375, %v1511
        %v1524 = vmul.f32 %v376, %v1512
        %v1525 = vmul.f32 %v377, %v1509
        %v1526 = vmul.f32 %v378, %v1510
        %v1527 = vmul.f32 %v379, %v1511
        %v1528 = vmul.f32 %v380, %v1512
        %v1545 = vrot.slane %v1513, 5
        %v1546 = vrot.slane %v1514, 5
        %v1547 = vrot.slane %v1515, 5
        %v1548 = vrot.slane %v1516, 5
        %v1549 = vrot.slane %v1517, 5
        %v1550 = vrot.slane %v1518, 5
        %v1551 = vrot.slane %v1519, 5
        %v1552 = vrot.slane %v1520, 5
        %v1553 = vrot.slane %v1521, 5
        %v1554 = vrot.slane %v1522, 5
        %v1555 = vrot.slane %v1523, 5
        %v1556 = vrot.slane %v1524, 5
        %v1557 = vrot.slane %v1525, 5
        %v1558 = vrot.slane %v1526, 5
        %v1559 = vrot.slane %v1527, 5
        %v1560 = vrot.slane %v1528, 5
        %v1577 = vadd.f32 %v1325, %v1545
        %v1578 = vadd.f32 %v1326, %v1546
        %v1579 = vadd.f32 %v1327, %v1547
        %v1580 = vadd.f32 %v1328, %v1548
        %v1581 = vadd.f32 %v1329, %v1549
        %v1582 = vadd.f32 %v1330, %v1550
        %v1583 = vadd.f32 %v1331, %v1551
        %v1584 = vadd.f32 %v1332, %v1552
        %v1585 = vadd.f32 %v1333, %v1553
        %v1586 = vadd.f32 %v1334, %v1554
        %v1587 = vadd.f32 %v1335, %v1555
        %v1588 = vadd.f32 %v1336, %v1556
        %v1589 = vadd.f32 %v1337, %v1557
        %v1590 = vadd.f32 %v1338, %v1558
        %v1591 = vadd.f32 %v1339, %v1559
        %v1592 = vadd.f32 %v1340, %v1560
        %v1593 = vperm.slane %v421, 5
        %v1594 = vperm.slane %v422, 5
        %v1595 = vperm.slane %v423, 5
        %v1596 = vperm.slane %v424, 5
        %v1597 = vmul.f32 %v365, %v1593
        %v1598 = vmul.f32 %v366, %v1594
        %v1599 = vmul.f32 %v367, %v1595
        %v1600 = vmul.f32 %v368, %v1596
        %v1601 = vmul.f32 %v369, %v1593
        %v1602 = vmul.f32 %v370, %v1594
        %v1603 = vmul.f32 %v371, %v1595
        %v1604 = vmul.f32 %v372, %v1596
        %v1605 = vmul.f32 %v373, %v1593
        %v1606 = vmul.f32 %v374, %v1594
        %v1607 = vmul.f32 %v375, %v1595
        %v1608 = vmul.f32 %v376, %v1596
        %v1609 = vmul.f32 %v377, %v1593
        %v1610 = vmul.f32 %v378, %v1594
        %v1611 = vmul.f32 %v379, %v1595
        %v1612 = vmul.f32 %v380, %v1596
        %v1629 = vrot.slane %v1597, 5
        %v1630 = vrot.slane %v1598, 5
        %v1631 = vrot.slane %v1599, 5
        %v1632 = vrot.slane %v1600, 5
        %v1633 = vrot.slane %v1601, 5
        %v1634 = vrot.slane %v1602, 5
        %v1635 = vrot.slane %v1603, 5
        %v1636 = vrot.slane %v1604, 5
        %v1637 = vrot.slane %v1605, 5
        %v1638 = vrot.slane %v1606, 5
        %v1639 = vrot.slane %v1607, 5
        %v1640 = vrot.slane %v1608, 5
        %v1641 = vrot.slane %v1609, 5
        %v1642 = vrot.slane %v1610, 5
        %v1643 = vrot.slane %v1611, 5
        %v1644 = vrot.slane %v1612, 5
        %v1661 = vadd.f32 %v1409, %v1629
        %v1662 = vadd.f32 %v1410, %v1630
        %v1663 = vadd.f32 %v1411, %v1631
        %v1664 = vadd.f32 %v1412, %v1632
        %v1665 = vadd.f32 %v1413, %v1633
        %v1666 = vadd.f32 %v1414, %v1634
        %v1667 = vadd.f32 %v1415, %v1635
        %v1668 = vadd.f32 %v1416, %v1636
        %v1669 = vadd.f32 %v1417, %v1637
        %v1670 = vadd.f32 %v1418, %v1638
        %v1671 = vadd.f32 %v1419, %v1639
        %v1672 = vadd.f32 %v1420, %v1640
        %v1673 = vadd.f32 %v1421, %v1641
        %v1674 = vadd.f32 %v1422, %v1642
        %v1675 = vadd.f32 %v1423, %v1643
        %v1676 = vadd.f32 %v1424, %v1644
        %v1677 = vperm.slane %v461, 5
        %v1678 = vperm.slane %v462, 5
        %v1679 = vperm.slane %v463, 5
        %v1680 = vperm.slane %v464, 5
        %v1681 = vmul.f32 %v365, %v1677
        %v1682 = vmul.f32 %v366, %v1678
        %v1683 = vmul.f32 %v367, %v1679
        %v1684 = vmul.f32 %v368, %v1680
        %v1685 = vmul.f32 %v369, %v1677
        %v1686 = vmul.f32 %v370, %v1678
        %v1687 = vmul.f32 %v371, %v1679
        %v1688 = vmul.f32 %v372, %v1680
        %v1689 = vmul.f32 %v373, %v1677
        %v1690 = vmul.f32 %v374, %v1678
        %v1691 = vmul.f32 %v375, %v1679
        %v1692 = vmul.f32 %v376, %v1680
        %v1693 = vmul.f32 %v377, %v1677
        %v1694 = vmul.f32 %v378, %v1678
        %v1695 = vmul.f32 %v379, %v1679
        %v1696 = vmul.f32 %v380, %v1680
        %v1713 = vrot.slane %v1681, 5
        %v1714 = vrot.slane %v1682, 5
        %v1715 = vrot.slane %v1683, 5
        %v1716 = vrot.slane %v1684, 5
        %v1717 = vrot.slane %v1685, 5
        %v1718 = vrot.slane %v1686, 5
        %v1719 = vrot.slane %v1687, 5
        %v1720 = vrot.slane %v1688, 5
        %v1721 = vrot.slane %v1689, 5
        %v1722 = vrot.slane %v1690, 5
        %v1723 = vrot.slane %v1691, 5
        %v1724 = vrot.slane %v1692, 5
        %v1725 = vrot.slane %v1693, 5
        %v1726 = vrot.slane %v1694, 5
        %v1727 = vrot.slane %v1695, 5
        %v1728 = vrot.slane %v1696, 5
        %v1745 = vadd.f32 %v1493, %v1713
        %v1746 = vadd.f32 %v1494, %v1714
        %v1747 = vadd.f32 %v1495, %v1715
        %v1748 = vadd.f32 %v1496, %v1716
        %v1749 = vadd.f32 %v1497, %v1717
        %v1750 = vadd.f32 %v1498, %v1718
        %v1751 = vadd.f32 %v1499, %v1719
        %v1752 = vadd.f32 %v1500, %v1720
        %v1753 = vadd.f32 %v1501, %v1721
        %v1754 = vadd.f32 %v1502, %v1722
        %v1755 = vadd.f32 %v1503, %v1723
        %v1756 = vadd.f32 %v1504, %v1724
        %v1757 = vadd.f32 %v1505, %v1725
        %v1758 = vadd.f32 %v1506, %v1726
        %v1759 = vadd.f32 %v1507, %v1727
        %v1760 = vadd.f32 %v1508, %v1728
        %v1761 = vperm.slane %v381, 6
        %v1762 = vperm.slane %v382, 6
        %v1763 = vperm.slane %v383, 6
        %v1764 = vperm.slane %v384, 6
        %v1765 = vmul.f32 %v365, %v1761
        %v1766 = vmul.f32 %v366, %v1762
        %v1767 = vmul.f32 %v367, %v1763
        %v1768 = vmul.f32 %v368, %v1764
        %v1769 = vmul.f32 %v369, %v1761
        %v1770 = vmul.f32 %v370, %v1762
        %v1771 = vmul.f32 %v371, %v1763
        %v1772 = vmul.f32 %v372, %v1764
        %v1773 = vmul.f32 %v373, %v1761
        %v1774 = vmul.f32 %v374, %v1762
        %v1775 = vmul.f32 %v375, %v1763
        %v1776 = vmul.f32 %v376, %v1764
        %v1777 = vmul.f32 %v377, %v1761
        %v1778 = vmul.f32 %v378, %v1762
        %v1779 = vmul.f32 %v379, %v1763
        %v1780 = vmul.f32 %v380, %v1764
        %v1797 = vrot.slane %v1765, 6
        %v1798 = vrot.slane %v1766, 6
        %v1799 = vrot.slane %v1767, 6
        %v1800 = vrot.slane %v1768, 6
        %v1801 = vrot.slane %v1769, 6
        %v1802 = vrot.slane %v1770, 6
        %v1803 = vrot.slane %v1771, 6
        %v1804 = vrot.slane %v1772, 6
        %v1805 = vrot.slane %v1773, 6
        %v1806 = vrot.slane %v1774, 6
        %v1807 = vrot.slane %v1775, 6
        %v1808 = vrot.slane %v1776, 6
        %v1809 = vrot.slane %v1777, 6
        %v1810 = vrot.slane %v1778, 6
        %v1811 = vrot.slane %v1779, 6
        %v1812 = vrot.slane %v1780, 6
        %v1829 = vadd.f32 %v1577, %v1797
        %v1830 = vadd.f32 %v1578, %v1798
        %v1831 = vadd.f32 %v1579, %v1799
        %v1832 = vadd.f32 %v1580, %v1800
        %v1833 = vadd.f32 %v1581, %v1801
        %v1834 = vadd.f32 %v1582, %v1802
        %v1835 = vadd.f32 %v1583, %v1803
        %v1836 = vadd.f32 %v1584, %v1804
        %v1837 = vadd.f32 %v1585, %v1805
        %v1838 = vadd.f32 %v1586, %v1806
        %v1839 = vadd.f32 %v1587, %v1807
        %v1840 = vadd.f32 %v1588, %v1808
        %v1841 = vadd.f32 %v1589, %v1809
        %v1842 = vadd.f32 %v1590, %v1810
        %v1843 = vadd.f32 %v1591, %v1811
        %v1844 = vadd.f32 %v1592, %v1812
        %v1845 = vperm.slane %v421, 6
        %v1846 = vperm.slane %v422, 6
        %v1847 = vperm.slane %v423, 6
        %v1848 = vperm.slane %v424, 6
        %v1849 = vmul.f32 %v365, %v1845
        %v1850 = vmul.f32 %v366, %v1846
        %v1851 = vmul.f32 %v367, %v1847
        %v1852 = vmul.f32 %v368, %v1848
        %v1853 = vmul.f32 %v369, %v1845
        %v1854 = vmul.f32 %v370, %v1846
        %v1855 = vmul.f32 %v371, %v1847
        %v1856 = vmul.f32 %v372, %v1848
        %v1857 = vmul.f32 %v373, %v1845
        %v1858 = vmul.f32 %v374, %v1846
        %v1859 = vmul.f32 %v375, %v1847
        %v1860 = vmul.f32 %v376, %v1848
        %v1861 = vmul.f32 %v377, %v1845
        %v1862 = vmul.f32 %v378, %v1846
        %v1863 = vmul.f32 %v379, %v1847
        %v1864 = vmul.f32 %v380, %v1848
        %v1881 = vrot.slane %v1849, 6
        %v1882 = vrot.slane %v1850, 6
        %v1883 = vrot.slane %v1851, 6
        %v1884 = vrot.slane %v1852, 6
        %v1885 = vrot.slane %v1853, 6
        %v1886 = vrot.slane %v1854, 6
        %v1887 = vrot.slane %v1855, 6
        %v1888 = vrot.slane %v1856, 6
        %v1889 = vrot.slane %v1857, 6
        %v1890 = vrot.slane %v1858, 6
        %v1891 = vrot.slane %v1859, 6
        %v1892 = vrot.slane %v1860, 6
        %v1893 = vrot.slane %v1861, 6
        %v1894 = vrot.slane %v1862, 6
        %v1895 = vrot.slane %v1863, 6
        %v1896 = vrot.slane %v1864, 6
        %v1913 = vadd.f32 %v1661, %v1881
        %v1914 = vadd.f32 %v1662, %v1882
        %v1915 = vadd.f32 %v1663, %v1883
        %v1916 = vadd.f32 %v1664, %v1884
        %v1917 = vadd.f32 %v1665, %v1885
        %v1918 = vadd.f32 %v1666, %v1886
        %v1919 = vadd.f32 %v1667, %v1887
        %v1920 = vadd.f32 %v1668, %v1888
        %v1921 = vadd.f32 %v1669, %v1889
        %v1922 = vadd.f32 %v1670, %v1890
        %v1923 = vadd.f32 %v1671, %v1891
        %v1924 = vadd.f32 %v1672, %v1892
        %v1925 = vadd.f32 %v1673, %v1893
        %v1926 = vadd.f32 %v1674, %v1894
        %v1927 = vadd.f32 %v1675, %v1895
        %v1928 = vadd.f32 %v1676, %v1896
        %v1929 = vperm.slane %v461, 6
        %v1930 = vperm.slane %v462, 6
        %v1931 = vperm.slane %v463, 6
        %v1932 = vperm.slane %v464, 6
        %v1933 = vmul.f32 %v365, %v1929
        %v1934 = vmul.f32 %v366, %v1930
        %v1935 = vmul.f32 %v367, %v1931
        %v1936 = vmul.f32 %v368, %v1932
        %v1937 = vmul.f32 %v369, %v1929
        %v1938 = vmul.f32 %v370, %v1930
        %v1939 = vmul.f32 %v371, %v1931
        %v1940 = vmul.f32 %v372, %v1932
        %v1941 = vmul.f32 %v373, %v1929
        %v1942 = vmul.f32 %v374, %v1930
        %v1943 = vmul.f32 %v375, %v1931
        %v1944 = vmul.f32 %v376, %v1932
        %v1945 = vmul.f32 %v377, %v1929
        %v1946 = vmul.f32 %v378, %v1930
        %v1947 = vmul.f32 %v379, %v1931
        %v1948 = vmul.f32 %v380, %v1932
        %v1965 = vrot.slane %v1933, 6
        %v1966 = vrot.slane %v1934, 6
        %v1967 = vrot.slane %v1935, 6
        %v1968 = vrot.slane %v1936, 6
        %v1969 = vrot.slane %v1937, 6
        %v1970 = vrot.slane %v1938, 6
        %v1971 = vrot.slane %v1939, 6
        %v1972 = vrot.slane %v1940, 6
        %v1973 = vrot.slane %v1941, 6
        %v1974 = vrot.slane %v1942, 6
        %v1975 = vrot.slane %v1943, 6
        %v1976 = vrot.slane %v1944, 6
        %v1977 = vrot.slane %v1945, 6
        %v1978 = vrot.slane %v1946, 6
        %v1979 = vrot.slane %v1947, 6
        %v1980 = vrot.slane %v1948, 6
        %v1997 = vadd.f32 %v1745, %v1965
        %v1998 = vadd.f32 %v1746, %v1966
        %v1999 = vadd.f32 %v1747, %v1967
        %v2000 = vadd.f32 %v1748, %v1968
        %v2001 = vadd.f32 %v1749, %v1969
        %v2002 = vadd.f32 %v1750, %v1970
        %v2003 = vadd.f32 %v1751, %v1971
        %v2004 = vadd.f32 %v1752, %v1972
        %v2005 = vadd.f32 %v1753, %v1973
        %v2006 = vadd.f32 %v1754, %v1974
        %v2007 = vadd.f32 %v1755, %v1975
        %v2008 = vadd.f32 %v1756, %v1976
        %v2009 = vadd.f32 %v1757, %v1977
        %v2010 = vadd.f32 %v1758, %v1978
        %v2011 = vadd.f32 %v1759, %v1979
        %v2012 = vadd.f32 %v1760, %v1980
        %v2013 = vperm.slane %v381, 7
        %v2014 = vperm.slane %v382, 7
        %v2015 = vperm.slane %v383, 7
        %v2016 = vperm.slane %v384, 7
        %v2017 = vmul.f32 %v365, %v2013
        %v2018 = vmul.f32 %v366, %v2014
        %v2019 = vmul.f32 %v367, %v2015
        %v2020 = vmul.f32 %v368, %v2016
        %v2021 = vmul.f32 %v369, %v2013
        %v2022 = vmul.f32 %v370, %v2014
        %v2023 = vmul.f32 %v371, %v2015
        %v2024 = vmul.f32 %v372, %v2016
        %v2025 = vmul.f32 %v373, %v2013
        %v2026 = vmul.f32 %v374, %v2014
        %v2027 = vmul.f32 %v375, %v2015
        %v2028 = vmul.f32 %v376, %v2016
        %v2029 = vmul.f32 %v377, %v2013
        %v2030 = vmul.f32 %v378, %v2014
        %v2031 = vmul.f32 %v379, %v2015
        %v2032 = vmul.f32 %v380, %v2016
        %v2049 = vrot.slane %v2017, 7
        %v2050 = vrot.slane %v2018, 7
        %v2051 = vrot.slane %v2019, 7
        %v2052 = vrot.slane %v2020, 7
        %v2053 = vrot.slane %v2021, 7
        %v2054 = vrot.slane %v2022, 7
        %v2055 = vrot.slane %v2023, 7
        %v2056 = vrot.slane %v2024, 7
        %v2057 = vrot.slane %v2025, 7
        %v2058 = vrot.slane %v2026, 7
        %v2059 = vrot.slane %v2027, 7
        %v2060 = vrot.slane %v2028, 7
        %v2061 = vrot.slane %v2029, 7
        %v2062 = vrot.slane %v2030, 7
        %v2063 = vrot.slane %v2031, 7
        %v2064 = vrot.slane %v2032, 7
        %v2081 = vadd.f32 %v1829, %v2049
        %v2082 = vadd.f32 %v1830, %v2050
        %v2083 = vadd.f32 %v1831, %v2051
        %v2084 = vadd.f32 %v1832, %v2052
        %v2085 = vadd.f32 %v1833, %v2053
        %v2086 = vadd.f32 %v1834, %v2054
        %v2087 = vadd.f32 %v1835, %v2055
        %v2088 = vadd.f32 %v1836, %v2056
        %v2089 = vadd.f32 %v1837, %v2057
        %v2090 = vadd.f32 %v1838, %v2058
        %v2091 = vadd.f32 %v1839, %v2059
        %v2092 = vadd.f32 %v1840, %v2060
        %v2093 = vadd.f32 %v1841, %v2061
        %v2094 = vadd.f32 %v1842, %v2062
        %v2095 = vadd.f32 %v1843, %v2063
        %v2096 = vadd.f32 %v1844, %v2064
        %v2097 = vperm.slane %v421, 7
        %v2098 = vperm.slane %v422, 7
        %v2099 = vperm.slane %v423, 7
        %v2100 = vperm.slane %v424, 7
        %v2101 = vmul.f32 %v365, %v2097
        %v2102 = vmul.f32 %v366, %v2098
        %v2103 = vmul.f32 %v367, %v2099
        %v2104 = vmul.f32 %v368, %v2100
        %v2105 = vmul.f32 %v369, %v2097
        %v2106 = vmul.f32 %v370, %v2098
        %v2107 = vmul.f32 %v371, %v2099
        %v2108 = vmul.f32 %v372, %v2100
        %v2109 = vmul.f32 %v373, %v2097
        %v2110 = vmul.f32 %v374, %v2098
        %v2111 = vmul.f32 %v375, %v2099
        %v2112 = vmul.f32 %v376, %v2100
        %v2113 = vmul.f32 %v377, %v2097
        %v2114 = vmul.f32 %v378, %v2098
        %v2115 = vmul.f32 %v379, %v2099
        %v2116 = vmul.f32 %v380, %v2100
        %v2133 = vrot.slane %v2101, 7
        %v2134 = vrot.slane %v2102, 7
        %v2135 = vrot.slane %v2103, 7
        %v2136 = vrot.slane %v2104, 7
        %v2137 = vrot.slane %v2105, 7
        %v2138 = vrot.slane %v2106, 7
        %v2139 = vrot.slane %v2107, 7
        %v2140 = vrot.slane %v2108, 7
        %v2141 = vrot.slane %v2109, 7
        %v2142 = vrot.slane %v2110, 7
        %v2143 = vrot.slane %v2111, 7
        %v2144 = vrot.slane %v2112, 7
        %v2145 = vrot.slane %v2113, 7
        %v2146 = vrot.slane %v2114, 7
        %v2147 = vrot.slane %v2115, 7
        %v2148 = vrot.slane %v2116, 7
        %v2165 = vadd.f32 %v1913, %v2133
        %v2166 = vadd.f32 %v1914, %v2134
        %v2167 = vadd.f32 %v1915, %v2135
        %v2168 = vadd.f32 %v1916, %v2136
        %v2169 = vadd.f32 %v1917, %v2137
        %v2170 = vadd.f32 %v1918, %v2138
        %v2171 = vadd.f32 %v1919, %v2139
        %v2172 = vadd.f32 %v1920, %v2140
        %v2173 = vadd.f32 %v1921, %v2141
        %v2174 = vadd.f32 %v1922, %v2142
        %v2175 = vadd.f32 %v1923, %v2143
        %v2176 = vadd.f32 %v1924, %v2144
        %v2177 = vadd.f32 %v1925, %v2145
        %v2178 = vadd.f32 %v1926, %v2146
        %v2179 = vadd.f32 %v1927, %v2147
        %v2180 = vadd.f32 %v1928, %v2148
        %v2181 = vperm.slane %v461, 7
        %v2182 = vperm.slane %v462, 7
        %v2183 = vperm.slane %v463, 7
        %v2184 = vperm.slane %v464, 7
        %v2185 = vmul.f32 %v365, %v2181
        %v2186 = vmul.f32 %v366, %v2182
        %v2187 = vmul.f32 %v367, %v2183
        %v2188 = vmul.f32 %v368, %v2184
        %v2189 = vmul.f32 %v369, %v2181
        %v2190 = vmul.f32 %v370, %v2182
        %v2191 = vmul.f32 %v371, %v2183
        %v2192 = vmul.f32 %v372, %v2184
        %v2193 = vmul.f32 %v373, %v2181
        %v2194 = vmul.f32 %v374, %v2182
        %v2195 = vmul.f32 %v375, %v2183
        %v2196 = vmul.f32 %v376, %v2184
        %v2197 = vmul.f32 %v377, %v2181
        %v2198 = vmul.f32 %v378, %v2182
        %v2199 = vmul.f32 %v379, %v2183
        %v2200 = vmul.f32 %v380, %v2184
        %v2217 = vrot.slane %v2185, 7
        %v2218 = vrot.slane %v2186, 7
        %v2219 = vrot.slane %v2187, 7
        %v2220 = vrot.slane %v2188, 7
        %v2221 = vrot.slane %v2189, 7
        %v2222 = vrot.slane %v2190, 7
        %v2223 = vrot.slane %v2191, 7
        %v2224 = vrot.slane %v2192, 7
        %v2225 = vrot.slane %v2193, 7
        %v2226 = vrot.slane %v2194, 7
        %v2227 = vrot.slane %v2195, 7
        %v2228 = vrot.slane %v2196, 7
        %v2229 = vrot.slane %v2197, 7
        %v2230 = vrot.slane %v2198, 7
        %v2231 = vrot.slane %v2199, 7
        %v2232 = vrot.slane %v2200, 7
        %v2249 = vadd.f32 %v1997, %v2217
        %v2250 = vadd.f32 %v1998, %v2218
        %v2251 = vadd.f32 %v1999, %v2219
        %v2252 = vadd.f32 %v2000, %v2220
        %v2253 = vadd.f32 %v2001, %v2221
        %v2254 = vadd.f32 %v2002, %v2222
        %v2255 = vadd.f32 %v2003, %v2223
        %v2256 = vadd.f32 %v2004, %v2224
        %v2257 = vadd.f32 %v2005, %v2225
        %v2258 = vadd.f32 %v2006, %v2226
        %v2259 = vadd.f32 %v2007, %v2227
        %v2260 = vadd.f32 %v2008, %v2228
        %v2261 = vadd.f32 %v2009, %v2229
        %v2262 = vadd.f32 %v2010, %v2230
        %v2263 = vadd.f32 %v2011, %v2231
        %v2264 = vadd.f32 %v2012, %v2232
        %v2265 = vld [vmem:[%s3] sm:$0xf]
        %v2266 = vpack.c.bf16 %v2081, %v2081
        %v2267 = vpack.c.bf16 %v2082, %v2082
        %v2268 = vpack.c.bf16 %v2083, %v2083
        %v2269 = vpack.c.bf16 %v2084, %v2084
        %v2270 = vpack.c.bf16 %v2085, %v2085
        %v2271 = vpack.c.bf16 %v2086, %v2086
        %v2272 = vpack.c.bf16 %v2087, %v2087
        %v2273 = vpack.c.bf16 %v2088, %v2088
        %v2274 = vpack.c.bf16 %v2089, %v2089
        %v2275 = vpack.c.bf16 %v2090, %v2090
        %v2276 = vpack.c.bf16 %v2091, %v2091
        %v2277 = vpack.c.bf16 %v2092, %v2092
        %v2278 = vpack.c.bf16 %v2093, %v2093
        %v2279 = vpack.c.bf16 %v2094, %v2094
        %v2280 = vpack.c.bf16 %v2095, %v2095
        %v2281 = vpack.c.bf16 %v2096, %v2096
        %s2282 = scalar_lea.vmem %s3, 4
        %v2283 = vld [vmem:[%s2282] sm:$0xf]
        %v2284 = vpack.c.bf16 %v2165, %v2165
        %v2285 = vpack.c.bf16 %v2166, %v2166
        %v2286 = vpack.c.bf16 %v2167, %v2167
        %v2287 = vpack.c.bf16 %v2168, %v2168
        %v2288 = vpack.c.bf16 %v2169, %v2169
        %v2289 = vpack.c.bf16 %v2170, %v2170
        %v2290 = vpack.c.bf16 %v2171, %v2171
        %v2291 = vpack.c.bf16 %v2172, %v2172
        %v2292 = vpack.c.bf16 %v2173, %v2173
        %v2293 = vpack.c.bf16 %v2174, %v2174
        %v2294 = vpack.c.bf16 %v2175, %v2175
        %v2295 = vpack.c.bf16 %v2176, %v2176
        %v2296 = vpack.c.bf16 %v2177, %v2177
        %v2297 = vpack.c.bf16 %v2178, %v2178
        %v2298 = vpack.c.bf16 %v2179, %v2179
        %v2299 = vpack.c.bf16 %v2180, %v2180
        %v2316 = vunpack.c.l.b16 %v2284
        %v2317 = vunpack.c.l.b16 %v2285
        %v2318 = vunpack.c.l.b16 %v2286
        %v2319 = vunpack.c.l.b16 %v2287
        %v2320 = vunpack.c.l.b16 %v2288
        %v2321 = vunpack.c.l.b16 %v2289
        %v2322 = vunpack.c.l.b16 %v2290
        %v2323 = vunpack.c.l.b16 %v2291
        %v2324 = vunpack.c.l.b16 %v2292
        %v2325 = vunpack.c.l.b16 %v2293
        %v2326 = vunpack.c.l.b16 %v2294
        %v2327 = vunpack.c.l.b16 %v2295
        %v2328 = vunpack.c.l.b16 %v2296
        %v2329 = vunpack.c.l.b16 %v2297
        %v2330 = vunpack.c.l.b16 %v2298
        %v2331 = vunpack.c.l.b16 %v2299
        %v2332 = vrot.slane %v2320, 7
        %vm2333 = vcmask 1041409
        %v2334 = vsel %vm2333, %v2332, %v2316
        %v2335 = vrot.slane %v2324, 6
        %vm2336 = vcmask 1042434
        %v2337 = vsel %vm2336, %v2335, %v2334
        %v2338 = vrot.slane %v2328, 5
        %vm2339 = vcmask 1043459
        %v2340 = vsel %vm2339, %v2338, %v2337
        %v2341 = vrot.slane %v2321, 7
        %v2342 = vsel %vm2333, %v2341, %v2317
        %v2343 = vrot.slane %v2325, 6
        %v2344 = vsel %vm2336, %v2343, %v2342
        %v2345 = vrot.slane %v2329, 5
        %v2346 = vsel %vm2339, %v2345, %v2344
        %v2347 = vrot.slane %v2322, 7
        %v2348 = vsel %vm2333, %v2347, %v2318
        %v2349 = vrot.slane %v2326, 6
        %v2350 = vsel %vm2336, %v2349, %v2348
        %v2351 = vrot.slane %v2330, 5
        %v2352 = vsel %vm2339, %v2351, %v2350
        %v2353 = vrot.slane %v2323, 7
        %v2354 = vsel %vm2333, %v2353, %v2319
        %v2355 = vrot.slane %v2327, 6
        %v2356 = vsel %vm2336, %v2355, %v2354
        %v2357 = vrot.slane %v2331, 5
        %v2358 = vsel %vm2339, %v2357, %v2356
        %v2359 = vpack.c.b16 %v2340, %v2340
        %v2360 = vpack.c.b16 %v2346, %v2346
        %v2361 = vpack.c.b16 %v2352, %v2352
        %v2362 = vpack.c.b16 %v2358, %v2358
        %vm2363 = vcmask 31744
        %v2365 = vsel %vm2363, %v2283, 0
        %vm2367 = vcmask 1041408
        %v2369 = vsel %vm2367, %v2359, 0
        %v2372 = vsel %vm2367, %v2360, 0
        %v2375 = vsel %vm2367, %v2361, 0
        %v2378 = vsel %vm2367, %v2362, 0
        %2380 = vmatpush.bf16.msra.mxu0 0
        %2381 = vmatpush.bf16.msra.mxu0 0
        %2382 = vmatpush.bf16.msra.mxu0 0
        %2383 = vmatpush.bf16.msra.mxu0 0
        %2384 = vmatpush.bf16.msra.mxu0 0
        %2385 = vmatpush.bf16.msra.mxu0 0
        %2386 = vmatpush.bf16.msra.mxu0 0
        %2387 = vmatpush.bf16.msra.mxu0 %v2369
        %2388 = vmatmul.bf16.gmra.mxu0 %v2365
        %v2389 = vpop.f32.mrf.mxu0
        %v2390 = vadd.f32 0.0, %v2389
        %v2391 = vpop.f32.mrf.mxu0
        %2392 = vdwg.mxu0
        %2393 = vmatpush.bf16.msra.mxu0 0
        %2394 = vmatpush.bf16.msra.mxu0 0
        %2395 = vmatpush.bf16.msra.mxu0 0
        %2396 = vmatpush.bf16.msra.mxu0 0
        %2397 = vmatpush.bf16.msra.mxu0 0
        %2398 = vmatpush.bf16.msra.mxu0 0
        %2399 = vmatpush.bf16.msra.mxu0 0
        %2400 = vmatpush.bf16.msra.mxu0 %v2372
        %2401 = vmatmul.bf16.gmra.mxu0 %v2365
        %v2402 = vpop.f32.mrf.mxu0
        %v2403 = vadd.f32 0.0, %v2402
        %v2404 = vpop.f32.mrf.mxu0
        %2405 = vdwg.mxu0
        %2406 = vmatpush.bf16.msra.mxu0 0
        %2407 = vmatpush.bf16.msra.mxu0 0
        %2408 = vmatpush.bf16.msra.mxu0 0
        %2409 = vmatpush.bf16.msra.mxu0 0
        %2410 = vmatpush.bf16.msra.mxu0 0
        %2411 = vmatpush.bf16.msra.mxu0 0
        %2412 = vmatpush.bf16.msra.mxu0 0
        %2413 = vmatpush.bf16.msra.mxu0 %v2375
        %2414 = vmatmul.bf16.gmra.mxu0 %v2365
        %v2415 = vpop.f32.mrf.mxu0
        %v2416 = vadd.f32 0.0, %v2415
        %v2417 = vpop.f32.mrf.mxu0
        %2418 = vdwg.mxu0
        %2419 = vmatpush.bf16.msra.mxu0 0
        %2420 = vmatpush.bf16.msra.mxu0 0
        %2421 = vmatpush.bf16.msra.mxu0 0
        %2422 = vmatpush.bf16.msra.mxu0 0
        %2423 = vmatpush.bf16.msra.mxu0 0
        %2424 = vmatpush.bf16.msra.mxu0 0
        %2425 = vmatpush.bf16.msra.mxu0 0
        %2426 = vmatpush.bf16.msra.mxu0 %v2378
        %2427 = vmatmul.bf16.gmra.mxu0 %v2365
        %v2428 = vpop.f32.mrf.mxu0
        %v2429 = vadd.f32 0.0, %v2428
        %v2430 = vpop.f32.mrf.mxu0
        %2431 = vdwg.mxu0
        %v2448 = vunpack.c.l.b16 %v2266
        %v2449 = vunpack.c.l.b16 %v2267
        %v2450 = vunpack.c.l.b16 %v2268
        %v2451 = vunpack.c.l.b16 %v2269
        %v2452 = vunpack.c.l.b16 %v2270
        %v2453 = vunpack.c.l.b16 %v2271
        %v2454 = vunpack.c.l.b16 %v2272
        %v2455 = vunpack.c.l.b16 %v2273
        %v2456 = vunpack.c.l.b16 %v2274
        %v2457 = vunpack.c.l.b16 %v2275
        %v2458 = vunpack.c.l.b16 %v2276
        %v2459 = vunpack.c.l.b16 %v2277
        %v2460 = vunpack.c.l.b16 %v2278
        %v2461 = vunpack.c.l.b16 %v2279
        %v2462 = vunpack.c.l.b16 %v2280
        %v2463 = vunpack.c.l.b16 %v2281
        %v2464 = vrot.slane %v2452, 7
        %v2465 = vsel %vm2333, %v2464, %v2448
        %v2466 = vrot.slane %v2456, 6
        %v2467 = vsel %vm2336, %v2466, %v2465
        %v2468 = vrot.slane %v2460, 5
        %v2469 = vsel %vm2339, %v2468, %v2467
        %v2470 = vrot.slane %v2453, 7
        %v2471 = vsel %vm2333, %v2470, %v2449
        %v2472 = vrot.slane %v2457, 6
        %v2473 = vsel %vm2336, %v2472, %v2471
        %v2474 = vrot.slane %v2461, 5
        %v2475 = vsel %vm2339, %v2474, %v2473
        %v2476 = vrot.slane %v2454, 7
        %v2477 = vsel %vm2333, %v2476, %v2450
        %v2478 = vrot.slane %v2458, 6
        %v2479 = vsel %vm2336, %v2478, %v2477
        %v2480 = vrot.slane %v2462, 5
        %v2481 = vsel %vm2339, %v2480, %v2479
        %v2482 = vrot.slane %v2455, 7
        %v2483 = vsel %vm2333, %v2482, %v2451
        %v2484 = vrot.slane %v2459, 6
        %v2485 = vsel %vm2336, %v2484, %v2483
        %v2486 = vrot.slane %v2463, 5
        %v2487 = vsel %vm2339, %v2486, %v2485
        %v2488 = vpack.c.b16 %v2469, %v2469
        %v2489 = vpack.c.b16 %v2475, %v2475
        %v2490 = vpack.c.b16 %v2481, %v2481
        %v2491 = vpack.c.b16 %v2487, %v2487
        %v2493 = vsel %vm2363, %v2265, 0
        %v2496 = vsel %vm2367, %v2488, 0
        %v2499 = vsel %vm2367, %v2489, 0
        %v2502 = vsel %vm2367, %v2490, 0
        %v2505 = vsel %vm2367, %v2491, 0
        %2507 = vmatpush.bf16.msra.mxu0 0
        %2508 = vmatpush.bf16.msra.mxu0 0
        %2509 = vmatpush.bf16.msra.mxu0 0
        %2510 = vmatpush.bf16.msra.mxu0 0
        %2511 = vmatpush.bf16.msra.mxu0 0
        %2512 = vmatpush.bf16.msra.mxu0 0
        %2513 = vmatpush.bf16.msra.mxu0 0
        %2514 = vmatpush.bf16.msra.mxu0 %v2496
        %2515 = vmatmul.bf16.gmra.mxu0 %v2493
        %v2516 = vpop.f32.mrf.mxu0
        %v2517 = vadd.f32 %v2390, %v2516
        %v2518 = vpop.f32.mrf.mxu0
        %2519 = vdwg.mxu0
        %2520 = vmatpush.bf16.msra.mxu0 0
        %2521 = vmatpush.bf16.msra.mxu0 0
        %2522 = vmatpush.bf16.msra.mxu0 0
        %2523 = vmatpush.bf16.msra.mxu0 0
        %2524 = vmatpush.bf16.msra.mxu0 0
        %2525 = vmatpush.bf16.msra.mxu0 0
        %2526 = vmatpush.bf16.msra.mxu0 0
        %2527 = vmatpush.bf16.msra.mxu0 %v2499
        %2528 = vmatmul.bf16.gmra.mxu0 %v2493
        %v2529 = vpop.f32.mrf.mxu0
        %v2530 = vadd.f32 %v2403, %v2529
        %v2531 = vpop.f32.mrf.mxu0
        %2532 = vdwg.mxu0
        %2533 = vmatpush.bf16.msra.mxu0 0
        %2534 = vmatpush.bf16.msra.mxu0 0
        %2535 = vmatpush.bf16.msra.mxu0 0
        %2536 = vmatpush.bf16.msra.mxu0 0
        %2537 = vmatpush.bf16.msra.mxu0 0
        %2538 = vmatpush.bf16.msra.mxu0 0
        %2539 = vmatpush.bf16.msra.mxu0 0
        %2540 = vmatpush.bf16.msra.mxu0 %v2502
        %2541 = vmatmul.bf16.gmra.mxu0 %v2493
        %v2542 = vpop.f32.mrf.mxu0
        %v2543 = vadd.f32 %v2416, %v2542
        %v2544 = vpop.f32.mrf.mxu0
        %2545 = vdwg.mxu0
        %2546 = vmatpush.bf16.msra.mxu0 0
        %2547 = vmatpush.bf16.msra.mxu0 0
        %2548 = vmatpush.bf16.msra.mxu0 0
        %2549 = vmatpush.bf16.msra.mxu0 0
        %2550 = vmatpush.bf16.msra.mxu0 0
        %2551 = vmatpush.bf16.msra.mxu0 0
        %2552 = vmatpush.bf16.msra.mxu0 0
        %2553 = vmatpush.bf16.msra.mxu0 %v2505
        %2554 = vmatmul.bf16.gmra.mxu0 %v2493
        %v2555 = vpop.f32.mrf.mxu0
        %v2556 = vadd.f32 %v2429, %v2555
        %v2557 = vpop.f32.mrf.mxu0
        %2558 = vdwg.mxu0
        %s2559 = scalar_lea.vmem %s3, 8
        %v2560 = vld [vmem:[%s2559] sm:$0xf]
        %v2561 = vpack.c.bf16 %v2249, %v2249
        %v2562 = vpack.c.bf16 %v2250, %v2250
        %v2563 = vpack.c.bf16 %v2251, %v2251
        %v2564 = vpack.c.bf16 %v2252, %v2252
        %v2565 = vpack.c.bf16 %v2253, %v2253
        %v2566 = vpack.c.bf16 %v2254, %v2254
        %v2567 = vpack.c.bf16 %v2255, %v2255
        %v2568 = vpack.c.bf16 %v2256, %v2256
        %v2569 = vpack.c.bf16 %v2257, %v2257
        %v2570 = vpack.c.bf16 %v2258, %v2258
        %v2571 = vpack.c.bf16 %v2259, %v2259
        %v2572 = vpack.c.bf16 %v2260, %v2260
        %v2573 = vpack.c.bf16 %v2261, %v2261
        %v2574 = vpack.c.bf16 %v2262, %v2262
        %v2575 = vpack.c.bf16 %v2263, %v2263
        %v2576 = vpack.c.bf16 %v2264, %v2264
        %v2593 = vunpack.c.l.b16 %v2561
        %v2594 = vunpack.c.l.b16 %v2562
        %v2595 = vunpack.c.l.b16 %v2563
        %v2596 = vunpack.c.l.b16 %v2564
        %v2597 = vunpack.c.l.b16 %v2565
        %v2598 = vunpack.c.l.b16 %v2566
        %v2599 = vunpack.c.l.b16 %v2567
        %v2600 = vunpack.c.l.b16 %v2568
        %v2601 = vunpack.c.l.b16 %v2569
        %v2602 = vunpack.c.l.b16 %v2570
        %v2603 = vunpack.c.l.b16 %v2571
        %v2604 = vunpack.c.l.b16 %v2572
        %v2605 = vunpack.c.l.b16 %v2573
        %v2606 = vunpack.c.l.b16 %v2574
        %v2607 = vunpack.c.l.b16 %v2575
        %v2608 = vunpack.c.l.b16 %v2576
        %v2609 = vrot.slane %v2597, 7
        %v2610 = vsel %vm2333, %v2609, %v2593
        %v2611 = vrot.slane %v2601, 6
        %v2612 = vsel %vm2336, %v2611, %v2610
        %v2613 = vrot.slane %v2605, 5
        %v2614 = vsel %vm2339, %v2613, %v2612
        %v2615 = vrot.slane %v2598, 7
        %v2616 = vsel %vm2333, %v2615, %v2594
        %v2617 = vrot.slane %v2602, 6
        %v2618 = vsel %vm2336, %v2617, %v2616
        %v2619 = vrot.slane %v2606, 5
        %v2620 = vsel %vm2339, %v2619, %v2618
        %v2621 = vrot.slane %v2599, 7
        %v2622 = vsel %vm2333, %v2621, %v2595
        %v2623 = vrot.slane %v2603, 6
        %v2624 = vsel %vm2336, %v2623, %v2622
        %v2625 = vrot.slane %v2607, 5
        %v2626 = vsel %vm2339, %v2625, %v2624
        %v2627 = vrot.slane %v2600, 7
        %v2628 = vsel %vm2333, %v2627, %v2596
        %v2629 = vrot.slane %v2604, 6
        %v2630 = vsel %vm2336, %v2629, %v2628
        %v2631 = vrot.slane %v2608, 5
        %v2632 = vsel %vm2339, %v2631, %v2630
        %v2633 = vpack.c.b16 %v2614, %v2614
        %v2634 = vpack.c.b16 %v2620, %v2620
        %v2635 = vpack.c.b16 %v2626, %v2626
        %v2636 = vpack.c.b16 %v2632, %v2632
        %v2638 = vsel %vm2363, %v2560, 0
        %v2641 = vsel %vm2367, %v2633, 0
        %v2644 = vsel %vm2367, %v2634, 0
        %v2647 = vsel %vm2367, %v2635, 0
        %v2650 = vsel %vm2367, %v2636, 0
        %2652 = vmatpush.bf16.msra.mxu0 0
        %2653 = vmatpush.bf16.msra.mxu0 0
        %2654 = vmatpush.bf16.msra.mxu0 0
        %2655 = vmatpush.bf16.msra.mxu0 0
        %2656 = vmatpush.bf16.msra.mxu0 0
        %2657 = vmatpush.bf16.msra.mxu0 0
        %2658 = vmatpush.bf16.msra.mxu0 0
        %2659 = vmatpush.bf16.msra.mxu0 %v2641
        %2660 = vmatmul.bf16.gmra.mxu0 %v2638
        %v2661 = vpop.f32.mrf.mxu0
        %v2662 = vadd.f32 0.0, %v2661
        %v2663 = vpop.f32.mrf.mxu0
        %2664 = vdwg.mxu0
        %2665 = vmatpush.bf16.msra.mxu0 0
        %2666 = vmatpush.bf16.msra.mxu0 0
        %2667 = vmatpush.bf16.msra.mxu0 0
        %2668 = vmatpush.bf16.msra.mxu0 0
        %2669 = vmatpush.bf16.msra.mxu0 0
        %2670 = vmatpush.bf16.msra.mxu0 0
        %2671 = vmatpush.bf16.msra.mxu0 0
        %2672 = vmatpush.bf16.msra.mxu0 %v2644
        %2673 = vmatmul.bf16.gmra.mxu0 %v2638
        %v2674 = vpop.f32.mrf.mxu0
        %v2675 = vadd.f32 0.0, %v2674
        %v2676 = vpop.f32.mrf.mxu0
        %2677 = vdwg.mxu0
        %2678 = vmatpush.bf16.msra.mxu0 0
        %2679 = vmatpush.bf16.msra.mxu0 0
        %2680 = vmatpush.bf16.msra.mxu0 0
        %2681 = vmatpush.bf16.msra.mxu0 0
        %2682 = vmatpush.bf16.msra.mxu0 0
        %2683 = vmatpush.bf16.msra.mxu0 0
        %2684 = vmatpush.bf16.msra.mxu0 0
        %2685 = vmatpush.bf16.msra.mxu0 %v2647
        %2686 = vmatmul.bf16.gmra.mxu0 %v2638
        %v2687 = vpop.f32.mrf.mxu0
        %v2688 = vadd.f32 0.0, %v2687
        %v2689 = vpop.f32.mrf.mxu0
        %2690 = vdwg.mxu0
        %2691 = vmatpush.bf16.msra.mxu0 0
        %2692 = vmatpush.bf16.msra.mxu0 0
        %2693 = vmatpush.bf16.msra.mxu0 0
        %2694 = vmatpush.bf16.msra.mxu0 0
        %2695 = vmatpush.bf16.msra.mxu0 0
        %2696 = vmatpush.bf16.msra.mxu0 0
        %2697 = vmatpush.bf16.msra.mxu0 0
        %2698 = vmatpush.bf16.msra.mxu0 %v2650
        %2699 = vmatmul.bf16.gmra.mxu0 %v2638
        %v2700 = vpop.f32.mrf.mxu0
        %v2701 = vadd.f32 0.0, %v2700
        %v2702 = vpop.f32.mrf.mxu0
        %2703 = vdwg.mxu0
        %v2704 = vadd.f32 %v2517, %v2662
        %v2705 = vadd.f32 %v2530, %v2675
        %v2706 = vadd.f32 %v2543, %v2688
        %v2707 = vadd.f32 %v2556, %v2701
        %v2708 = vadd.f32 %v2704, %v2705
        %v2709 = vadd.f32 %v2708, %v2706
        %v2710 = vadd.f32 %v2709, %v2707
        %2711 = vadd.xlane.f32.xlu0 %v2710
        %v2712 = vpop.xlane.xlu0 %2711
        %v2713 = vmul.f32 %v2712, 0.001953125
        %v2714 = vsub.f32 %v2704, %v2713
        %v2715 = vsub.f32 %v2705, %v2713
        %v2716 = vsub.f32 %v2706, %v2713
        %v2717 = vsub.f32 %v2707, %v2713
        %v2718 = vmul.f32 %v2714, %v2714
        %v2719 = vmul.f32 %v2715, %v2715
        %v2720 = vmul.f32 %v2716, %v2716
        %v2721 = vmul.f32 %v2717, %v2717
        %v2722 = vadd.f32 %v2718, %v2719
        %v2723 = vadd.f32 %v2722, %v2720
        %v2724 = vadd.f32 %v2723, %v2721
        %2725 = vadd.xlane.f32.xlu0 %v2724
        %v2726 = vpop.xlane.xlu0 %2725
        %v2727 = vmul.f32 %v2726, 0.001953125
        %v2728 = vadd.f32 %v2727, 1e-05
        %v2729 = vrsqrt.pop %v2728
        %v2730 = vmul.f32 %v2729, %v2728
        %v2731 = vmul.f32 %v2730, %v2729
        %v2732 = vmul.f32 0.5, %v2731
        %v2733 = vsub.f32 1.5, %v2732
        %v2734 = vmul.f32 %v2729, %v2733
        %vm2735 = vweird.f32 %v2728
        %vm2736 = vweird.f32 %v2729
        %vm2737 = vmor %vm2735, %vm2736
        %v2738 = vsel %vm2737, %v2729, %v2734
        %v2739 = vmul.f32 %v2714, %v2738
        %v2740 = vmul.f32 %v2715, %v2738
        %v2741 = vmul.f32 %v2716, %v2738
        %v2742 = vmul.f32 %v2717, %v2738
        %v2743 = vmax.f32 %v2739, 0.0
        %v2744 = vmax.f32 %v2740, 0.0
        %v2745 = vmax.f32 %v2741, 0.0
        %v2746 = vmax.f32 %v2742, 0.0
        %v2747 = vpack.c.bf16 %v2744, %v2743
        %v2748 = vpack.c.bf16 %v2746, %v2745
        %v2749 = vld [vmem:[#allocation7] sm:$0xf]
        %v2752 = vunpack.c.h.b16 %v2747
        %v2753 = vunpack.c.l.b16 %v2748
        %v2754 = vunpack.c.h.b16 %v2748
        %v2755 = vpack.c.b16 %v2752, %v2752
        %v2756 = vpack.c.b16 %v2753, %v2753
        %v2757 = vpack.c.b16 %v2754, %v2754
        %s2758 = scalar_lea.vmem [#allocation7], 4
        %v2759 = vld [vmem:[%s2758] sm:$0xf]
        %vm2760 = vcmask 64512
        %v2762 = vsel %vm2760, %v2759, 0
        %vm2764 = vcmask 1043456
        %v2766 = vsel %vm2764, %v2755, 0
        %v2769 = vsel %vm2764, %v2756, 0
        %v2772 = vsel %vm2764, %v2757, 0
        %v2775 = vsel %vm2764, %v2747, 0
        %2777 = vmatpush.bf16.msra.mxu0 0
        %2778 = vmatpush.bf16.msra.mxu0 0
        %2779 = vmatpush.bf16.msra.mxu0 0
        %2780 = vmatpush.bf16.msra.mxu0 0
        %2781 = vmatpush.bf16.msra.mxu0 0
        %2782 = vmatpush.bf16.msra.mxu0 0
        %2783 = vmatpush.bf16.msra.mxu0 0
        %2784 = vmatpush.bf16.msra.mxu0 %v2766
        %2785 = vmatmul.bf16.gmra.mxu0 %v2762
        %v2786 = vpop.f32.mrf.mxu0
        %v2787 = vadd.f32 0.0, %v2786
        %v2788 = vpop.f32.mrf.mxu0
        %2789 = vdwg.mxu0
        %2790 = vmatpush.bf16.msra.mxu0 0
        %2791 = vmatpush.bf16.msra.mxu0 0
        %2792 = vmatpush.bf16.msra.mxu0 0
        %2793 = vmatpush.bf16.msra.mxu0 0
        %2794 = vmatpush.bf16.msra.mxu0 0
        %2795 = vmatpush.bf16.msra.mxu0 0
        %2796 = vmatpush.bf16.msra.mxu0 0
        %2797 = vmatpush.bf16.msra.mxu0 %v2769
        %2798 = vmatmul.bf16.gmra.mxu0 %v2762
        %v2799 = vpop.f32.mrf.mxu0
        %v2800 = vadd.f32 0.0, %v2799
        %v2801 = vpop.f32.mrf.mxu0
        %2802 = vdwg.mxu0
        %2803 = vmatpush.bf16.msra.mxu0 0
        %2804 = vmatpush.bf16.msra.mxu0 0
        %2805 = vmatpush.bf16.msra.mxu0 0
        %2806 = vmatpush.bf16.msra.mxu0 0
        %2807 = vmatpush.bf16.msra.mxu0 0
        %2808 = vmatpush.bf16.msra.mxu0 0
        %2809 = vmatpush.bf16.msra.mxu0 0
        %2810 = vmatpush.bf16.msra.mxu0 %v2772
        %2811 = vmatmul.bf16.gmra.mxu0 %v2762
        %v2812 = vpop.f32.mrf.mxu0
        %v2813 = vadd.f32 0.0, %v2812
        %v2814 = vpop.f32.mrf.mxu0
        %2815 = vdwg.mxu0
        %2816 = vmatpush.bf16.msra.mxu0 0
        %2817 = vmatpush.bf16.msra.mxu0 0
        %2818 = vmatpush.bf16.msra.mxu0 0
        %2819 = vmatpush.bf16.msra.mxu0 0
        %2820 = vmatpush.bf16.msra.mxu0 0
        %2821 = vmatpush.bf16.msra.mxu0 0
        %2822 = vmatpush.bf16.msra.mxu0 0
        %2823 = vmatpush.bf16.msra.mxu0 %v2775
        %2824 = vmatmul.bf16.gmra.mxu0 %v2762
        %v2825 = vpop.f32.mrf.mxu0
        %v2826 = vadd.f32 0.0, %v2825
        %v2827 = vpop.f32.mrf.mxu0
        %2828 = vdwg.mxu0
        %v2829 = vunpack.c.l.b16 %v2747
        %v2830 = vpack.c.b16 %v2829, %v2829
        %v2832 = vsel %vm2760, %v2749, 0
        %v2835 = vsel %vm2764, %v2830, 0
        %2837 = vmatpush.bf16.msra.mxu0 0
        %2838 = vmatpush.bf16.msra.mxu0 0
        %2839 = vmatpush.bf16.msra.mxu0 0
        %2840 = vmatpush.bf16.msra.mxu0 0
        %2841 = vmatpush.bf16.msra.mxu0 0
        %2842 = vmatpush.bf16.msra.mxu0 0
        %2843 = vmatpush.bf16.msra.mxu0 0
        %2844 = vmatpush.bf16.msra.mxu0 %v2835
        %2845 = vmatmul.bf16.gmra.mxu0 %v2832
        %v2846 = vpop.f32.mrf.mxu0
        %v2847 = vadd.f32 %v2787, %v2846
        %v2848 = vpop.f32.mrf.mxu0
        %2849 = vdwg.mxu0
        %2850 = vmatpush.bf16.msra.mxu0 0
        %2851 = vmatpush.bf16.msra.mxu0 0
        %2852 = vmatpush.bf16.msra.mxu0 0
        %2853 = vmatpush.bf16.msra.mxu0 0
        %2854 = vmatpush.bf16.msra.mxu0 0
        %2855 = vmatpush.bf16.msra.mxu0 0
        %2856 = vmatpush.bf16.msra.mxu0 0
        %2857 = vmatpush.bf16.msra.mxu0 %v2766
        %2858 = vmatmul.bf16.gmra.mxu0 %v2832
        %v2859 = vpop.f32.mrf.mxu0
        %v2860 = vadd.f32 %v2800, %v2859
        %v2861 = vpop.f32.mrf.mxu0
        %2862 = vdwg.mxu0
        %2863 = vmatpush.bf16.msra.mxu0 0
        %2864 = vmatpush.bf16.msra.mxu0 0
        %2865 = vmatpush.bf16.msra.mxu0 0
        %2866 = vmatpush.bf16.msra.mxu0 0
        %2867 = vmatpush.bf16.msra.mxu0 0
        %2868 = vmatpush.bf16.msra.mxu0 0
        %2869 = vmatpush.bf16.msra.mxu0 0
        %2870 = vmatpush.bf16.msra.mxu0 %v2769
        %2871 = vmatmul.bf16.gmra.mxu0 %v2832
        %v2872 = vpop.f32.mrf.mxu0
        %v2873 = vadd.f32 %v2813, %v2872
        %v2874 = vpop.f32.mrf.mxu0
        %2875 = vdwg.mxu0
        %2876 = vmatpush.bf16.msra.mxu0 0
        %2877 = vmatpush.bf16.msra.mxu0 0
        %2878 = vmatpush.bf16.msra.mxu0 0
        %2879 = vmatpush.bf16.msra.mxu0 0
        %2880 = vmatpush.bf16.msra.mxu0 0
        %2881 = vmatpush.bf16.msra.mxu0 0
        %2882 = vmatpush.bf16.msra.mxu0 0
        %2883 = vmatpush.bf16.msra.mxu0 %v2772
        %2884 = vmatmul.bf16.gmra.mxu0 %v2832
        %v2885 = vpop.f32.mrf.mxu0
        %v2886 = vadd.f32 %v2826, %v2885
        %v2887 = vpop.f32.mrf.mxu0
        %2888 = vdwg.mxu0
        %s2889 = scalar_lea.vmem [#allocation7], 8
        %v2890 = vld [vmem:[%s2889] sm:$0xf]
        %v2892 = vsel %vm2760, %v2890, 0
        %2894 = vmatpush.bf16.msra.mxu0 0
        %2895 = vmatpush.bf16.msra.mxu0 0
        %2896 = vmatpush.bf16.msra.mxu0 0
        %2897 = vmatpush.bf16.msra.mxu0 0
        %2898 = vmatpush.bf16.msra.mxu0 0
        %2899 = vmatpush.bf16.msra.mxu0 0
        %2900 = vmatpush.bf16.msra.mxu0 0
        %2901 = vmatpush.bf16.msra.mxu0 %v2769
        %2902 = vmatmul.bf16.gmra.mxu0 %v2892
        %v2903 = vpop.f32.mrf.mxu0
        %v2904 = vadd.f32 0.0, %v2903
        %v2905 = vpop.f32.mrf.mxu0
        %2906 = vdwg.mxu0
        %2907 = vmatpush.bf16.msra.mxu0 0
        %2908 = vmatpush.bf16.msra.mxu0 0
        %2909 = vmatpush.bf16.msra.mxu0 0
        %2910 = vmatpush.bf16.msra.mxu0 0
        %2911 = vmatpush.bf16.msra.mxu0 0
        %2912 = vmatpush.bf16.msra.mxu0 0
        %2913 = vmatpush.bf16.msra.mxu0 0
        %2914 = vmatpush.bf16.msra.mxu0 %v2772
        %2915 = vmatmul.bf16.gmra.mxu0 %v2892
        %v2916 = vpop.f32.mrf.mxu0
        %v2917 = vadd.f32 0.0, %v2916
        %v2918 = vpop.f32.mrf.mxu0
        %2919 = vdwg.mxu0
        %2920 = vmatpush.bf16.msra.mxu0 0
        %2921 = vmatpush.bf16.msra.mxu0 0
        %2922 = vmatpush.bf16.msra.mxu0 0
        %2923 = vmatpush.bf16.msra.mxu0 0
        %2924 = vmatpush.bf16.msra.mxu0 0
        %2925 = vmatpush.bf16.msra.mxu0 0
        %2926 = vmatpush.bf16.msra.mxu0 0
        %2927 = vmatpush.bf16.msra.mxu0 %v2835
        %2928 = vmatmul.bf16.gmra.mxu0 %v2892
        %v2929 = vpop.f32.mrf.mxu0
        %v2930 = vadd.f32 0.0, %v2929
        %v2931 = vpop.f32.mrf.mxu0
        %2932 = vdwg.mxu0
        %2933 = vmatpush.bf16.msra.mxu0 0
        %2934 = vmatpush.bf16.msra.mxu0 0
        %2935 = vmatpush.bf16.msra.mxu0 0
        %2936 = vmatpush.bf16.msra.mxu0 0
        %2937 = vmatpush.bf16.msra.mxu0 0
        %2938 = vmatpush.bf16.msra.mxu0 0
        %2939 = vmatpush.bf16.msra.mxu0 0
        %2940 = vmatpush.bf16.msra.mxu0 %v2766
        %2941 = vmatmul.bf16.gmra.mxu0 %v2892
        %v2942 = vpop.f32.mrf.mxu0
        %v2943 = vadd.f32 0.0, %v2942
        %v2944 = vpop.f32.mrf.mxu0
        %2945 = vdwg.mxu0
        %v2946 = vadd.f32 %v2847, %v2904
        %v2947 = vadd.f32 %v2860, %v2917
        %v2948 = vadd.f32 %v2873, %v2930
        %v2949 = vadd.f32 %v2886, %v2943
        %v2950 = vadd.f32 %v2946, %v2947
        %v2951 = vadd.f32 %v2950, %v2948
        %v2952 = vadd.f32 %v2951, %v2949
        %2953 = vadd.xlane.f32.xlu0 %v2952
        %v2954 = vpop.xlane.xlu0 %2953
        %v2955 = vmul.f32 %v2954, 0.001953125
        %v2956 = vsub.f32 %v2946, %v2955
        %v2957 = vsub.f32 %v2947, %v2955
        %v2958 = vsub.f32 %v2948, %v2955
        %v2959 = vsub.f32 %v2949, %v2955
        %v2960 = vmul.f32 %v2956, %v2956
        %v2961 = vmul.f32 %v2957, %v2957
        %v2962 = vmul.f32 %v2958, %v2958
        %v2963 = vmul.f32 %v2959, %v2959
        %v2964 = vadd.f32 %v2960, %v2961
        %v2965 = vadd.f32 %v2964, %v2962
        %v2966 = vadd.f32 %v2965, %v2963
        %2967 = vadd.xlane.f32.xlu0 %v2966
        %v2968 = vpop.xlane.xlu0 %2967
        %v2969 = vmul.f32 %v2968, 0.001953125
        %v2970 = vadd.f32 %v2969, 1e-05
        %v2971 = vrsqrt.pop %v2970
        %v2972 = vmul.f32 %v2971, %v2970
        %v2973 = vmul.f32 %v2972, %v2971
        %v2974 = vmul.f32 0.5, %v2973
        %v2975 = vsub.f32 1.5, %v2974
        %v2976 = vmul.f32 %v2971, %v2975
        %vm2977 = vweird.f32 %v2970
        %vm2978 = vweird.f32 %v2971
        %vm2979 = vmor %vm2977, %vm2978
        %v2980 = vsel %vm2979, %v2971, %v2976
        %v2981 = vmul.f32 %v2956, %v2980
        %v2982 = vmul.f32 %v2957, %v2980
        %v2983 = vmul.f32 %v2958, %v2980
        %v2984 = vmul.f32 %v2959, %v2980
        %v2985 = vmax.f32 %v2981, 0.0
        %v2986 = vmax.f32 %v2982, 0.0
        %v2987 = vmax.f32 %v2983, 0.0
        %v2988 = vmax.f32 %v2984, 0.0
        %v2989 = vld [vmem:[%s5] sm:$0xf]
        %v2990 = vld [vmem:[%s349] sm:$0xff]
        %2992 = vst [vmem:[#allocation1] ss:$4 sm:$0xff] %v2990
        %v2993 = vld.sshfl [vmem:[#allocation1] sm:$0xff pattern:$0x73625140]
        %v2994 = vld.sshfl [vmem:[#allocation1 + $0x8] sm:$0xff pattern:$0x73625140]
        %v2995 = vld.sshfl [vmem:[#allocation1 + $0x10] sm:$0xff pattern:$0x73625140]
        %v2996 = vld.sshfl [vmem:[#allocation1 + $0x18] sm:$0xff pattern:$0x73625140]
        %v2998 = vsel %vm2363, %v2989, 0
        %v3000 = vsel %vm2367, %v2993, 0
        %v3002 = vsel %vm2367, %v2994, 0
        %v3004 = vsel %vm2367, %v2995, 0
        %v3006 = vsel %vm2367, %v2996, 0
        %3008 = vmatpush.bf16.msra.mxu0 0
        %3009 = vmatpush.bf16.msra.mxu0 0
        %3010 = vmatpush.bf16.msra.mxu0 0
        %3011 = vmatpush.bf16.msra.mxu0 0
        %3012 = vmatpush.bf16.msra.mxu0 0
        %3013 = vmatpush.bf16.msra.mxu0 0
        %3014 = vmatpush.bf16.msra.mxu0 0
        %3015 = vmatpush.bf16.msra.mxu0 %v3000
        %3016 = vmatmul.bf16.gmra.mxu0 %v2998
        %v3017 = vpop.f32.mrf.mxu0
        %v3018 = vadd.f32 0.0, %v3017
        %v3019 = vpop.f32.mrf.mxu0
        %3020 = vdwg.mxu0
        %3021 = vmatpush.bf16.msra.mxu0 0
        %3022 = vmatpush.bf16.msra.mxu0 0
        %3023 = vmatpush.bf16.msra.mxu0 0
        %3024 = vmatpush.bf16.msra.mxu0 0
        %3025 = vmatpush.bf16.msra.mxu0 0
        %3026 = vmatpush.bf16.msra.mxu0 0
        %3027 = vmatpush.bf16.msra.mxu0 0
        %3028 = vmatpush.bf16.msra.mxu0 %v3002
        %3029 = vmatmul.bf16.gmra.mxu0 %v2998
        %v3030 = vpop.f32.mrf.mxu0
        %v3031 = vadd.f32 0.0, %v3030
        %v3032 = vpop.f32.mrf.mxu0
        %3033 = vdwg.mxu0
        %3034 = vmatpush.bf16.msra.mxu0 0
        %3035 = vmatpush.bf16.msra.mxu0 0
        %3036 = vmatpush.bf16.msra.mxu0 0
        %3037 = vmatpush.bf16.msra.mxu0 0
        %3038 = vmatpush.bf16.msra.mxu0 0
        %3039 = vmatpush.bf16.msra.mxu0 0
        %3040 = vmatpush.bf16.msra.mxu0 0
        %3041 = vmatpush.bf16.msra.mxu0 %v3004
        %3042 = vmatmul.bf16.gmra.mxu0 %v2998
        %v3043 = vpop.f32.mrf.mxu0
        %v3044 = vadd.f32 0.0, %v3043
        %v3045 = vpop.f32.mrf.mxu0
        %3046 = vdwg.mxu0
        %3047 = vmatpush.bf16.msra.mxu0 0
        %3048 = vmatpush.bf16.msra.mxu0 0
        %3049 = vmatpush.bf16.msra.mxu0 0
        %3050 = vmatpush.bf16.msra.mxu0 0
        %3051 = vmatpush.bf16.msra.mxu0 0
        %3052 = vmatpush.bf16.msra.mxu0 0
        %3053 = vmatpush.bf16.msra.mxu0 0
        %3054 = vmatpush.bf16.msra.mxu0 %v3006
        %3055 = vmatmul.bf16.gmra.mxu0 %v2998
        %v3056 = vpop.f32.mrf.mxu0
        %v3057 = vadd.f32 0.0, %v3056
        %v3058 = vpop.f32.mrf.mxu0
        %3059 = vdwg.mxu0
        %v3060 = vadd.f32 %v3018, %v3031
        %v3061 = vadd.f32 %v3060, %v3044
        %v3062 = vadd.f32 %v3061, %v3057
        %3063 = vadd.xlane.f32.xlu0 %v3062
        %v3064 = vpop.xlane.xlu0 %3063
        %v3065 = vmul.f32 %v3064, 0.001953125
        %v3066 = vsub.f32 %v3018, %v3065
        %v3067 = vsub.f32 %v3031, %v3065
        %v3068 = vsub.f32 %v3044, %v3065
        %v3069 = vsub.f32 %v3057, %v3065
        %v3070 = vmul.f32 %v3066, %v3066
        %v3071 = vmul.f32 %v3067, %v3067
        %v3072 = vmul.f32 %v3068, %v3068
        %v3073 = vmul.f32 %v3069, %v3069
        %v3074 = vadd.f32 %v3070, %v3071
        %v3075 = vadd.f32 %v3074, %v3072
        %v3076 = vadd.f32 %v3075, %v3073
        %3077 = vadd.xlane.f32.xlu0 %v3076
        %v3078 = vpop.xlane.xlu0 %3077
        %v3079 = vmul.f32 %v3078, 0.001953125
        %v3080 = vadd.f32 %v3079, 1e-05
        %v3081 = vrsqrt.pop %v3080
        %v3082 = vmul.f32 %v3081, %v3080
        %v3083 = vmul.f32 %v3082, %v3081
        %v3084 = vmul.f32 0.5, %v3083
        %v3085 = vsub.f32 1.5, %v3084
        %v3086 = vmul.f32 %v3081, %v3085
        %vm3087 = vweird.f32 %v3080
        %vm3088 = vweird.f32 %v3081
        %vm3089 = vmor %vm3087, %vm3088
        %v3090 = vsel %vm3089, %v3081, %v3086
        %v3091 = vmul.f32 %v3066, %v3090
        %v3092 = vmul.f32 %v3067, %v3090
        %v3093 = vmul.f32 %v3068, %v3090
        %v3094 = vmul.f32 %v3069, %v3090
        %v3095 = vmax.f32 %v3091, 0.0
        %v3096 = vmax.f32 %v3092, 0.0
        %v3097 = vmax.f32 %v3093, 0.0
        %v3098 = vmax.f32 %v3094, 0.0
        %v3099 = vadd.f32 %v2985, %v3095
        %v3100 = vadd.f32 %v2986, %v3096
        %v3101 = vadd.f32 %v2987, %v3097
        %v3102 = vadd.f32 %v2988, %v3098
        %3103 = vst [vmem:[%s344] sm:$0xff] %v3099
        %3104 = vst [vmem:[%s344 + $0x8] sm:$0xff] %v3100
        %3105 = vst [vmem:[%s344 + $0x10] sm:$0xff] %v3101
        %3106 = vst [vmem:[%s344 + $0x18] sm:$0xff] %v3102
        %s3107 = sand.u32 %s175, 1
        %s3108 = scalar_lea.sflag [#allocation4], %s3107
        %s3109 = sand.u32 %s175, 1
        %s3110 = smul.addr %s3109, 32
        %s3111 = scalar_lea.vmem [#allocation8], %s3110
        // Predicated region
        $region57: #{tpu_custom_call.1} parent=43 // pred_check
          %p3112 = pneg %p185
        $region58: #{tpu_custom_call.1} parent=43 // pred_check_branch
          %3114 = sbr.rel (%p3112) target = $region60
        $region59: #{tpu_custom_call.1} parent=43 // pred_region
          %3116 = vsyncadd %s3108, 0
          %s3117 = smul.addr %s26, 4
          %s3118 = smul.addr %s3117, 8
          %s3119 = scalar_lea.hbm %s6, %s3118
          %s3121 = sshll.u32 %s3111, 4
          %s3122 = int_to_ptr.vmem [resolvable:$true] %s3121
          %s3123 = sshll.u32 %s3119, 4
          %s3124 = int_to_ptr.hbm [resolvable:$true] %s3123
          %3126 = dma.vmem_to_hbm [thread:$0]  %s3122, 512, %s3124, %s3108
        $region60: #{tpu_custom_call.1} parent=43 // pred_fallthru
          _
      $region44: #{tpu_custom_call.1} parent=5 // pred_fallthru
        _
      %p3127 = scmp.le.s32.totalorder 2, %s21
      // Predicated region
      $region61: #{tpu_custom_call.1} parent=5 // pred_check
        %p3128 = pneg %p3127
      $region62: #{tpu_custom_call.1} parent=5 // pred_check_branch
        %3130 = sbr.rel (%p3128) target = $region64
      $region63: #{tpu_custom_call.1} parent=5 // pred_region
        %s3131 = ssub.s32 %s21, 2
        // Predicated region
        $region65: #{tpu_custom_call.1} parent=63 // pred_check
          %p3132 = pneg %p191
        $region66: #{tpu_custom_call.1} parent=63 // pred_check_branch
          %3134 = sbr.rel (%p3132) target = $region68
        $region67: #{tpu_custom_call.1} parent=63 // pred_region
          %s3135 = sand.u32 %s176, 1
          %s3136 = scalar_lea.sflag [#allocation4], %s3135
          %s3137 = sand.u32 %s176, 1
          %s3138 = smul.addr %s3137, 32
          %s3139 = scalar_lea.vmem [#allocation8], %s3138
          %3141 = dma.done %s3136, 512
        $region68: #{tpu_custom_call.1} parent=63 // pred_fallthru
          _
      $region64: #{tpu_custom_call.1} parent=5 // pred_fallthru
        _
    $region6: #{tpu_custom_call.1} parent=1 // loop_footer
      %s25 = sadd.s32 1, %s21
    $region7: #{tpu_custom_call.1} parent=1 // loop_footer_branch
      %20 = sbr.rel target = $region3
    $region8: #{tpu_custom_call.1} parent=1 // loop_exit
      _
    %3142 = vsyncpa [#allocation3], 1
    %s3143 = scalar_lea.sflag [#allocation3], 1
    %3144 = vsyncpa %s3143, 1
    %3145 = vsyncpa [#allocation6], 1
    %s3146 = scalar_lea.sflag [#allocation6], 1
    %3147 = vsyncpa %s3146, 1
    %3148 = vsyncpa [#allocation4], 1
    %s3149 = scalar_lea.sflag [#allocation4], 1
    %3150 = vsyncpa %s3149, 1

</llo_original>
